<compile_context>
chip_gen: v7x
topology: tpu7x:2x2x1
jax: 0.10.0
libtpu: 0.0.40
codegen_flags: <defaults>
</compile_context>

<pallas_src>
import functools

import jax
import jax.numpy as jnp
import numpy as np
from jax.experimental import pallas as pl
from jax.experimental.pallas import tpu as pltpu

N_LAYERS = 2      # static layer count (matches the module's n_layers)
LANES = 128       # TPU vreg lane width; small-model padding target


# ----------------------------------------------------------------------------
# Kernel
# ----------------------------------------------------------------------------
def _gaussian_lstm_kernel(
    x_ref, eps_ref, w_ref, b_ref, wh_ref, bh_ref, h0_ref, c0_ref,
    out_ref, hout_ref, cout_ref,
    h_st, c_st,
    *, out_size,
):
    P = x_ref.shape[-1]          # 128 padded lanes
    B = x_ref.shape[1]
    O = out_size
    n_layers = w_ref.shape[0]
    t = pl.program_id(0)

    # Load the recurrent state into VMEM scratch once; it stays resident for
    # the whole sequence (grid axis is "arbitrary" => sequential steps).
    @pl.when(t == 0)
    def _():
        h_st[...] = h0_ref[...]
        c_st[...] = c0_ref[...]

    h_in = x_ref[0]                                   # (B, P), x padded with zeros
    for l in range(n_layers):                         # static unroll (n_layers small)
        h_prev = h_st[l]
        c_prev = c_st[l]
        # One fused MXU matmul per layer: [x_or_h | h_prev] @ [Wih~ ; Whh~].
        xh = jnp.concatenate([h_in, h_prev], axis=-1)                     # (B, 2P)
        gates = jnp.dot(xh, w_ref[l], preferred_element_type=jnp.float32) + b_ref[l]
        # Gates were scattered wrapper-side so each gate owns a full 128-lane
        # block: slices below are whole-vreg (lane-aligned), not masked extracts.
        i_g = jax.nn.sigmoid(gates[:, 0 * P:1 * P])
        f_g = jax.nn.sigmoid(gates[:, 1 * P:2 * P])
        g_g = jnp.tanh(gates[:, 2 * P:3 * P])
        o_g = jax.nn.sigmoid(gates[:, 3 * P:4 * P])
        # Pad lanes stay exactly zero: zero weight cols/bias -> preact 0 ->
        # c_pad = 0.5*0 + 0.5*tanh(0) = 0, h_pad = 0.5*tanh(0) = 0.
        c_new = f_g * c_prev + i_g * g_g
        h_new = o_g * jnp.tanh(c_new)
        h_st[l] = h_new
        c_st[l] = c_new
        h_in = h_new

    # Fused mu/logvar heads: one matmul -> two 128-lane blocks:
    #   block0 = [mu | logvar | logvar | 0],  block1 = [0 | 0 | mu | 0]
    head = jnp.dot(h_in, wh_ref[...], preferred_element_type=jnp.float32) + bh_ref[...]
    blk0 = head[:, :P]
    blk1 = head[:, P:]
    lane = jax.lax.broadcasted_iota(jnp.int32, (B, P), 1)
    # torch: logvar = logvar.mul(0.5).exp_()  ->  std
    base = jnp.where(lane >= O, jnp.exp(0.5 * blk0), blk0)      # [mu | std | std | ...]
    z_lanes = (lane >= 2 * O) & (lane < 3 * O)
    # z = eps * std + mu  (eps was placed in the z lanes wrapper-side)
    out_ref[0] = jnp.where(z_lanes, eps_ref[0] * base + blk1, base)

    # Single lane-dense state writeback at the end of the sequence.
    @pl.when(t == pl.num_programs(0) - 1)
    def _():
        hout_ref[...] = h_st[...]
        cout_ref[...] = c_st[...]


# ----------------------------------------------------------------------------
# Wrapper-side weight packing (one-time layout plumbing, exact algebra)
# ----------------------------------------------------------------------------
def pack_gaussian_lstm_params(params):
    """Fold embed into layer 0, fuse [Wih;Whh] per layer and [mu|logvar] heads,
    and scatter each gate / head into its own 128-lane block."""
    HIGH = jax.lax.Precision.HIGHEST
    we, be = params["we"], params["be"]
    wih, whh, bih, bhh = params["wih"], params["whh"], params["bih"], params["bhh"]
    in_size, H = we.shape
    O = params["wmu"].shape[1]
    P = LANES
    L = wih.shape[0]
    assert in_size <= P and H <= P and 3 * O <= P, (
        "small-model kernel: pads to a single 128-lane block; tile for larger sizes")

    def scatter_gates(w):  # (rows, 4H) -> (rows, 4P), gate k -> lanes [k*P, k*P+H)
        out = jnp.zeros((w.shape[0], 4 * P), jnp.float32)
        for k in range(4):
            out = out.at[:, k * P:k * P + H].set(w[:, k * H:(k + 1) * H])
        return out

    def pad_rows(w, rows):
        return jnp.zeros((rows,) + w.shape[1:], jnp.float32).at[:w.shape[0]].set(w)

    ws, bs = [], []
    for l in range(L):
        if l == 0:
            # Embed Linear folded into layer 0 (exact algebraic identity).
            w_x = jnp.dot(we, wih[0], precision=HIGH)                      # (I, 4H)
            b_l = jnp.dot(be, wih[0], precision=HIGH) + bih[0] + bhh[0]    # (1, 4H)
        else:
            w_x = wih[l]
            b_l = bih[l] + bhh[l]
        top = pad_rows(scatter_gates(w_x), P)        # rows for padded x / h_in lanes
        bot = pad_rows(scatter_gates(whh[l]), P)     # rows for padded h_prev lanes
        ws.append(jnp.concatenate([top, bot], axis=0))        # (2P, 4P)
        bs.append(scatter_gates(b_l))                          # (1, 4P)

    wmu, wlv = params["wmu"], params["wlv"]
    bmu, blv = params["bmu"], params["blv"]
    blk0 = (jnp.zeros((H, P), jnp.float32)
            .at[:, 0:O].set(wmu).at[:, O:2 * O].set(wlv).at[:, 2 * O:3 * O].set(wlv))
    blk1 = jnp.zeros((H, P), jnp.float32).at[:, 2 * O:3 * O].set(wmu)
    whead = pad_rows(jnp.concatenate([blk0, blk1], axis=1), P)             # (P, 2P)
    bb0 = (jnp.zeros((1, P), jnp.float32)
           .at[:, 0:O].set(bmu).at[:, O:2 * O].set(blv).at[:, 2 * O:3 * O].set(blv))
    bb1 = jnp.zeros((1, P), jnp.float32).at[:, 2 * O:3 * O].set(bmu)
    bhead = jnp.concatenate([bb0, bb1], axis=1)                            # (1, 2P)

    # TODO(synk): at production sizes cast these to bf16 (keep f32 accumulation).
    return {"wstack": jnp.stack(ws), "bstack": jnp.stack(bs),
            "whead": whead, "bhead": bhead}


# ----------------------------------------------------------------------------
# Forward wrapper
# ----------------------------------------------------------------------------
@jax.jit
def gaussian_lstm_forward(x_seq, h0, c0, packed, eps_seq):
    """x_seq: (T, B, input_size); h0/c0: (n_layers, B, H); eps_seq: (T, B, output_size).
    Returns (z, mu, std, h_out, c_out) — one module forward per time step."""
    T, B, in_size = x_seq.shape
    n_layers, _, H = h0.shape
    O = eps_seq.shape[-1]
    P = LANES
    f32 = jnp.float32

    # Lane-dense padding (pure layout plumbing; zero lanes are inert in-kernel).
    x_p = jnp.zeros((T, B, P), f32).at[..., :in_size].set(x_seq)
    eps_p = jnp.zeros((T, B, P), f32).at[..., 2 * O:3 * O].set(eps_seq)   # z lanes
    h0_p = jnp.zeros((n_layers, B, P), f32).at[..., :H].set(h0)
    c0_p = jnp.zeros((n_layers, B, P), f32).at[..., :H].set(c0)

    seq3 = lambda t: (t, 0, 0)
    const3 = lambda t: (0, 0, 0)
    const2 = lambda t: (0, 0)

    out_slab, h_out_p, c_out_p = pl.pallas_call(
        functools.partial(_gaussian_lstm_kernel, out_size=O),
        grid=(T,),
        in_specs=[
            pl.BlockSpec((1, B, P), seq3),                    # x_t
            pl.BlockSpec((1, B, P), seq3),                    # eps_t
            pl.BlockSpec((n_layers, 2 * P, 4 * P), const3),   # fused [Wih;Whh] (resident)
            pl.BlockSpec((n_layers, 1, 4 * P), const3),       # fused gate biases
            pl.BlockSpec((P, 2 * P), const2),                 # fused mu/logvar head weight
            pl.BlockSpec((1, 2 * P), const2),                 # fused head bias
            pl.BlockSpec((n_layers, B, P), const3),           # h0 (read once at t==0)
            pl.BlockSpec((n_layers, B, P), const3),           # c0
        ],
        out_specs=[
            pl.BlockSpec((1, B, P), seq3),                    # [mu|std|z|pad] per step
            pl.BlockSpec((n_layers, B, P), const3),           # final h
            pl.BlockSpec((n_layers, B, P), const3),           # final c
        ],
        out_shape=[
            jax.ShapeDtypeStruct((T, B, P), f32),
            jax.ShapeDtypeStruct((n_layers, B, P), f32),
            jax.ShapeDtypeStruct((n_layers, B, P), f32),
        ],
        scratch_shapes=[
            pltpu.VMEM((n_layers, B, P), f32),                # resident h state
            pltpu.VMEM((n_layers, B, P), f32),                # resident c state
        ],
        input_output_aliases={6: 1, 7: 2},                    # h0 -> h_out, c0 -> c_out
        compiler_params=pltpu.CompilerParams(
            dimension_semantics=("arbitrary",),               # recurrent => sequential grid
        ),
    )(x_p, eps_p, packed["wstack"], packed["bstack"],
      packed["whead"], packed["bhead"], h0_p, c0_p)

    mu = out_slab[..., 0:O]
    std = out_slab[..., O:2 * O]
    z = out_slab[..., 2 * O:3 * O]
    return z, mu, std, h_out_p[..., :H], c_out_p[..., :H]


# ----------------------------------------------------------------------------
# References
# ----------------------------------------------------------------------------
def _module_reference(x_seq, h0, c0, params, eps_seq, precision=None):
    """Pure-JAX, module-faithful reference (unfused, unfolded)."""
    H = params["we"].shape[1]
    dot = functools.partial(jnp.dot, precision=precision)
    h = [h0[l] for l in range(N_LAYERS)]
    c = [c0[l] for l in range(N_LAYERS)]
    zs, mus, stds = [], [], []
    for t in range(x_seq.shape[0]):
        h_in = dot(x_seq[t], params["we"]) + params["be"]
        for l in range(N_LAYERS):
            gates = (dot(h_in, params["wih"][l]) + params["bih"][l]
                     + dot(h[l], params["whh"][l]) + params["bhh"][l])
            i_g = jax.nn.sigmoid(gates[:, 0:H])
            f_g = jax.nn.sigmoid(gates[:, H:2 * H])
            g_g = jnp.tanh(gates[:, 2 * H:3 * H])
            o_g = jax.nn.sigmoid(gates[:, 3 * H:4 * H])
            c[l] = f_g * c[l] + i_g * g_g
            h[l] = o_g * jnp.tanh(c[l])
            h_in = h[l]
        mu = dot(h_in, params["wmu"]) + params["bmu"]
        std = jnp.exp(0.5 * (dot(h_in, params["wlv"]) + params["blv"]))
        zs.append(eps_seq[t] * std + mu)
        mus.append(mu)
        stds.append(std)
    return (jnp.stack(zs), jnp.stack(mus), jnp.stack(stds), jnp.stack(h), jnp.stack(c))


def _fused_reference(x_seq, h0, c0, packed, eps_seq, precision=None):
    """Plain-JAX structural twin of the kernel (same packed weights / fused dots)."""
    T, B, in_size = x_seq.shape
    L, _, H = h0.shape
    O = eps_seq.shape[-1]
    P = LANES
    dot = functools.partial(jnp.dot, precision=precision)
    lane = jnp.arange(P)[None, :]
    x_p = jnp.zeros((T, B, P), jnp.float32).at[..., :in_size].set(x_seq)
    eps_p = jnp.zeros((T, B, P), jnp.float32).at[..., 2 * O:3 * O].set(eps_seq)
    h = jnp.zeros((L, B, P), jnp.float32).at[..., :H].set(h0)
    c = jnp.zeros((L, B, P), jnp.float32).at[..., :H].set(c0)
    slabs = []
    for t in range(T):
        h_in = x_p[t]
        for l in range(L):
            xh = jnp.concatenate([h_in, h[l]], axis=-1)
            gates = dot(xh, packed["wstack"][l]) + packed["bstack"][l]
            i_g = jax.nn.sigmoid(gates[:, 0:P])
            f_g = jax.nn.sigmoid(gates[:, P:2 * P])
            g_g = jnp.tanh(gates[:, 2 * P:3 * P])
            o_g = jax.nn.sigmoid(gates[:, 3 * P:4 * P])
            c_new = f_g * c[l] + i_g * g_g
            h_new = o_g * jnp.tanh(c_new)
            h = h.at[l].set(h_new)
            c = c.at[l].set(c_new)
            h_in = h_new
        head = dot(h_in, packed["whead"]) + packed["bhead"]
        blk0, blk1 = head[:, :P], head[:, P:]
        base = jnp.where(lane >= O, jnp.exp(0.5 * blk0), blk0)
        slabs.append(jnp.where((lane >= 2 * O) & (lane < 3 * O),
                               eps_p[t] * base + blk1, base))
    slab = jnp.stack(slabs)
    return (slab[..., 2 * O:3 * O], slab[..., 0:O], slab[..., O:2 * O],
            h[..., :H], c[..., :H])


def _init_params(key, input_size, output_size, hidden_size, n_layers):
    ks = jax.random.split(key, 10)
    s = 0.1
    return {
        "we":  s * jax.random.normal(ks[0], (input_size, hidden_size), jnp.float32),
        "be":  s * jax.random.normal(ks[1], (1, hidden_size), jnp.float32),
        "wih": s * jax.random.normal(ks[2], (n_layers, hidden_size, 4 * hidden_size), jnp.float32),
        "whh": s * jax.random.normal(ks[3], (n_layers, hidden_size, 4 * hidden_size), jnp.float32),
        "bih": s * jax.random.normal(ks[4], (n_layers, 1, 4 * hidden_size), jnp.float32),
        "bhh": s * jax.random.normal(ks[5], (n_layers, 1, 4 * hidden_size), jnp.float32),
        "wmu": s * jax.random.normal(ks[6], (hidden_size, output_size), jnp.float32),
        "bmu": s * jax.random.normal(ks[7], (1, output_size), jnp.float32),
        "wlv": s * jax.random.normal(ks[8], (hidden_size, output_size), jnp.float32),
        "blv": s * jax.random.normal(ks[9], (1, output_size), jnp.float32),
    }


if __name__ == "__main__":
    T, B, INPUT, OUTPUT, HIDDEN = 8, 2, 16, 8, 32

    key = jax.random.PRNGKey(0)
    kp, kx, kh, kc, ke = jax.random.split(key, 5)
    params = _init_params(kp, INPUT, OUTPUT, HIDDEN, N_LAYERS)
    x_seq = jax.random.normal(kx, (T, B, INPUT), jnp.float32)
    h0 = jax.random.normal(kh, (N_LAYERS, B, HIDDEN), jnp.float32)
    c0 = jax.random.normal(kc, (N_LAYERS, B, HIDDEN), jnp.float32)
    # eps ~ N(0,1): the module draws it internally; passed in for determinism.
    eps_seq = jax.random.normal(ke, (T, B, OUTPUT), jnp.float32)

    packed = pack_gaussian_lstm_params(params)
    out = gaussian_lstm_forward(x_seq, h0, c0, packed, eps_seq)
    out = jax.block_until_ready(out)

    # (1) Lowering check: kernel vs. structurally identical JAX twin (same packed
    #     weights, same fused dots).  Tolerance covers f32 reassociation /
    #     transcendental differences accumulated over the T-step recurrence.
    twin = _fused_reference(x_seq, h0, c0, packed, eps_seq)
    for got, want in zip(out, twin):
        np.testing.assert_allclose(np.asarray(got), np.asarray(want),
                                   rtol=1e-4, atol=1e-4)

    # (2) Semantics check: the folded/fused algebra vs. the module-faithful
    #     reference, both at full f32 matmul precision.
    HIGH = jax.lax.Precision.HIGHEST
    twin_hi = _fused_reference(x_seq, h0, c0, packed, eps_seq, precision=HIGH)
    mod_hi = _module_reference(x_seq, h0, c0, params, eps_seq, precision=HIGH)
    for got, want in zip(twin_hi, mod_hi):
        np.testing.assert_allclose(np.asarray(got), np.asarray(want),
                                   rtol=1e-4, atol=1e-4)

    print("KERNEL_OK")
</pallas_src>

<mosaic_0001>
module attributes {stable_mosaic.version = 11 : i64} {
  func.func @_gaussian_lstm_kernel(%arg0: i32, %arg1: memref<1x2x128xf32, #tpu.memory_space<vmem>>, %arg2: memref<1x2x128xf32, #tpu.memory_space<vmem>>, %arg3: memref<2x256x512xf32, #tpu.memory_space<vmem>>, %arg4: memref<2x1x512xf32, #tpu.memory_space<vmem>>, %arg5: memref<128x256xf32, #tpu.memory_space<vmem>>, %arg6: memref<1x256xf32, #tpu.memory_space<vmem>>, %arg7: memref<2x2x128xf32, #tpu.memory_space<vmem>>, %arg8: memref<2x2x128xf32, #tpu.memory_space<vmem>>, %arg9: memref<1x2x128xf32, #tpu.memory_space<vmem>>, %arg10: memref<2x2x128xf32, #tpu.memory_space<vmem>>, %arg11: memref<2x2x128xf32, #tpu.memory_space<vmem>>, %arg12: memref<2x2x128xf32, #tpu.memory_space<vmem>>, %arg13: memref<2x2x128xf32, #tpu.memory_space<vmem>>) attributes {dimension_semantics = [#tpu.dimension_semantics<arbitrary>], iteration_bounds = array<i64: 8>, scalar_prefetch = 0 : i64, scratch_operands = 2 : i64, tpu.core_type = #tpu.core_type<tc>, window_params = [{transform_indices = @transform_0, window_bounds = array<i64: 1, 2, 128>}, {transform_indices = @transform_1, window_bounds = array<i64: 1, 2, 128>}, {pipeline_mode = #tpu.pipeline_mode<synchronous>, transform_indices = @transform_2, window_bounds = array<i64: 2, 256, 512>}, {pipeline_mode = #tpu.pipeline_mode<synchronous>, transform_indices = @transform_3, window_bounds = array<i64: 2, 1, 512>}, {pipeline_mode = #tpu.pipeline_mode<synchronous>, transform_indices = @transform_4, window_bounds = array<i64: 128, 256>}, {pipeline_mode = #tpu.pipeline_mode<synchronous>, transform_indices = @transform_5, window_bounds = array<i64: 1, 256>}, {pipeline_mode = #tpu.pipeline_mode<synchronous>, transform_indices = @transform_6, window_bounds = array<i64: 2, 2, 128>}, {pipeline_mode = #tpu.pipeline_mode<synchronous>, transform_indices = @transform_7, window_bounds = array<i64: 2, 2, 128>}, {transform_indices = @transform_8, window_bounds = array<i64: 1, 2, 128>}, {pipeline_mode = #tpu.pipeline_mode<synchronous>, transform_indices = @transform_9, window_bounds = array<i64: 2, 2, 128>}, {pipeline_mode = #tpu.pipeline_mode<synchronous>, transform_indices = @transform_10, window_bounds = array<i64: 2, 2, 128>}]} {
    %c0_i32 = arith.constant 0 : i32
    %0 = arith.cmpi eq, %arg0, %c0_i32 : i32
    %1 = arith.extui %0 : i1 to i32
    %c0_i32_0 = arith.constant 0 : i32
    %2 = arith.cmpi ne, %1, %c0_i32_0 : i32
    scf.if %2 {
      %c0_58 = arith.constant 0 : index
      %c0_59 = arith.constant 0 : index
      %c0_60 = arith.constant 0 : index
      %121 = vector.load %arg7[%c0_58, %c0_59, %c0_60] : memref<2x2x128xf32, #tpu.memory_space<vmem>>, vector<2x2x128xf32>
      %c0_61 = arith.constant 0 : index
      %c0_62 = arith.constant 0 : index
      %c0_63 = arith.constant 0 : index
      %122 = vector.load %arg12[%c0_61, %c0_62, %c0_63] : memref<2x2x128xf32, #tpu.memory_space<vmem>>, vector<2x2x128xf32>
      tpu.vector_store %arg12[%c0_61, %c0_62, %c0_63], %121 {strides = array<i32>} : memref<2x2x128xf32, #tpu.memory_space<vmem>>, vector<2x2x128xf32>,
      %c0_64 = arith.constant 0 : index
      %c0_65 = arith.constant 0 : index
      %c0_66 = arith.constant 0 : index
      %123 = vector.load %arg8[%c0_64, %c0_65, %c0_66] : memref<2x2x128xf32, #tpu.memory_space<vmem>>, vector<2x2x128xf32>
      %c0_67 = arith.constant 0 : index
      %c0_68 = arith.constant 0 : index
      %c0_69 = arith.constant 0 : index
      %124 = vector.load %arg13[%c0_67, %c0_68, %c0_69] : memref<2x2x128xf32, #tpu.memory_space<vmem>>, vector<2x2x128xf32>
      tpu.vector_store %arg13[%c0_67, %c0_68, %c0_69], %123 {strides = array<i32>} : memref<2x2x128xf32, #tpu.memory_space<vmem>>, vector<2x2x128xf32>,
    } else {
    }
    %c0 = arith.constant 0 : index
    %c0_1 = arith.constant 0 : index
    %c0_2 = arith.constant 0 : index
    %3 = vector.load %arg1[%c0, %c0_1, %c0_2] : memref<1x2x128xf32, #tpu.memory_space<vmem>>, vector<1x2x128xf32>
    %4 = vector.shape_cast %3 : vector<1x2x128xf32> to vector<2x128xf32>
    %c0_3 = arith.constant 0 : index
    %c0_4 = arith.constant 0 : index
    %c0_5 = arith.constant 0 : index
    %5 = vector.load %arg12[%c0_3, %c0_4, %c0_5] : memref<2x2x128xf32, #tpu.memory_space<vmem>>, vector<1x2x128xf32>
    %6 = vector.shape_cast %5 : vector<1x2x128xf32> to vector<2x128xf32>
    %c0_6 = arith.constant 0 : index
    %c0_7 = arith.constant 0 : index
    %c0_8 = arith.constant 0 : index
    %7 = vector.load %arg13[%c0_6, %c0_7, %c0_8] : memref<2x2x128xf32, #tpu.memory_space<vmem>>, vector<1x2x128xf32>
    %8 = vector.shape_cast %7 : vector<1x2x128xf32> to vector<2x128xf32>
    %9 = tpu.concatenate %4, %6 in 1 : vector<2x128xf32>, vector<2x128xf32> -> vector<2x256xf32>
    %c0_9 = arith.constant 0 : index
    %c0_10 = arith.constant 0 : index
    %c0_11 = arith.constant 0 : index
    %10 = vector.load %arg3[%c0_9, %c0_10, %c0_11] : memref<2x256x512xf32, #tpu.memory_space<vmem>>, vector<1x256x512xf32>
    %11 = vector.shape_cast %10 : vector<1x256x512xf32> to vector<256x512xf32>
    %cst = arith.constant dense<0.000000e+00> : vector<2x512xf32>
    %12 = tpu.matmul %9, %11, %cst {dimension_numbers = #tpu.dot_dimension_numbers<[1], [0], [0], [1], [0, 0, 1, 1], [], []>} : vector<2x256xf32>, vector<256x512xf32>, vector<2x512xf32> -> vector<2x512xf32>
    %c0_12 = arith.constant 0 : index
    %c0_13 = arith.constant 0 : index
    %c0_14 = arith.constant 0 : index
    %13 = vector.load %arg4[%c0_12, %c0_13, %c0_14] : memref<2x1x512xf32, #tpu.memory_space<vmem>>, vector<1x1x512xf32>
    %14 = vector.shape_cast %13 : vector<1x1x512xf32> to vector<1x512xf32>
    %15 = vector.broadcast %14 : vector<1x512xf32> to vector<2x512xf32>
    %16 = arith.addf %12, %15 : vector<2x512xf32>
    %17 = vector.extract_strided_slice %16 {offsets = [0, 0], sizes = [2, 128], strides = [1, 1]} : vector<2x512xf32> to vector<2x128xf32>
    %18 = arith.negf %17 : vector<2x128xf32>
    %19 = math.exp %18 : vector<2x128xf32>
    %cst_15 = arith.constant 1.000000e+00 : f32
    %20 = vector.broadcast %cst_15 : f32 to vector<2x128xf32>
    %21 = arith.addf %20, %19 : vector<2x128xf32>
    %22 = arith.divf %20, %21 : vector<2x128xf32>
    %23 = vector.extract_strided_slice %16 {offsets = [0, 128], sizes = [2, 128], strides = [1, 1]} : vector<2x512xf32> to vector<2x128xf32>
    %24 = arith.negf %23 : vector<2x128xf32>
    %25 = math.exp %24 : vector<2x128xf32>
    %cst_16 = arith.constant 1.000000e+00 : f32
    %26 = vector.broadcast %cst_16 : f32 to vector<2x128xf32>
    %27 = arith.addf %26, %25 : vector<2x128xf32>
    %28 = arith.divf %26, %27 : vector<2x128xf32>
    %29 = vector.extract_strided_slice %16 {offsets = [0, 256], sizes = [2, 128], strides = [1, 1]} : vector<2x512xf32> to vector<2x128xf32>
    %30 = math.tanh %29 : vector<2x128xf32>
    %31 = vector.extract_strided_slice %16 {offsets = [0, 384], sizes = [2, 128], strides = [1, 1]} : vector<2x512xf32> to vector<2x128xf32>
    %32 = arith.negf %31 : vector<2x128xf32>
    %33 = math.exp %32 : vector<2x128xf32>
    %cst_17 = arith.constant 1.000000e+00 : f32
    %34 = vector.broadcast %cst_17 : f32 to vector<2x128xf32>
    %35 = arith.addf %34, %33 : vector<2x128xf32>
    %36 = arith.divf %34, %35 : vector<2x128xf32>
    %37 = arith.mulf %28, %8 : vector<2x128xf32>
    %38 = arith.mulf %22, %30 : vector<2x128xf32>
    %39 = arith.addf %37, %38 : vector<2x128xf32>
    %40 = math.tanh %39 : vector<2x128xf32>
    %41 = arith.mulf %36, %40 : vector<2x128xf32>
    %c0_18 = arith.constant 0 : index
    %c0_19 = arith.constant 0 : index
    %c0_20 = arith.constant 0 : index
    %42 = vector.load %arg12[%c0_18, %c0_19, %c0_20] : memref<2x2x128xf32, #tpu.memory_space<vmem>>, vector<1x2x128xf32>
    %43 = vector.shape_cast %42 : vector<1x2x128xf32> to vector<2x128xf32>
    %44 = vector.shape_cast %41 : vector<2x128xf32> to vector<1x2x128xf32>
    tpu.vector_store %arg12[%c0_18, %c0_19, %c0_20], %44 {strides = array<i32>} : memref<2x2x128xf32, #tpu.memory_space<vmem>>, vector<1x2x128xf32>,
    %c0_21 = arith.constant 0 : index
    %c0_22 = arith.constant 0 : index
    %c0_23 = arith.constant 0 : index
    %45 = vector.load %arg13[%c0_21, %c0_22, %c0_23] : memref<2x2x128xf32, #tpu.memory_space<vmem>>, vector<1x2x128xf32>
    %46 = vector.shape_cast %45 : vector<1x2x128xf32> to vector<2x128xf32>
    %47 = vector.shape_cast %39 : vector<2x128xf32> to vector<1x2x128xf32>
    tpu.vector_store %arg13[%c0_21, %c0_22, %c0_23], %47 {strides = array<i32>} : memref<2x2x128xf32, #tpu.memory_space<vmem>>, vector<1x2x128xf32>,
    %c1 = arith.constant 1 : index
    %c0_24 = arith.constant 0 : index
    %c0_25 = arith.constant 0 : index
    %48 = vector.load %arg12[%c1, %c0_24, %c0_25] : memref<2x2x128xf32, #tpu.memory_space<vmem>>, vector<1x2x128xf32>
    %49 = vector.shape_cast %48 : vector<1x2x128xf32> to vector<2x128xf32>
    %c1_26 = arith.constant 1 : index
    %c0_27 = arith.constant 0 : index
    %c0_28 = arith.constant 0 : index
    %50 = vector.load %arg13[%c1_26, %c0_27, %c0_28] : memref<2x2x128xf32, #tpu.memory_space<vmem>>, vector<1x2x128xf32>
    %51 = vector.shape_cast %50 : vector<1x2x128xf32> to vector<2x128xf32>
    %52 = tpu.concatenate %41, %49 in 1 : vector<2x128xf32>, vector<2x128xf32> -> vector<2x256xf32>
    %c1_29 = arith.constant 1 : index
    %c0_30 = arith.constant 0 : index
    %c0_31 = arith.constant 0 : index
    %53 = vector.load %arg3[%c1_29, %c0_30, %c0_31] : memref<2x256x512xf32, #tpu.memory_space<vmem>>, vector<1x256x512xf32>
    %54 = vector.shape_cast %53 : vector<1x256x512xf32> to vector<256x512xf32>
    %cst_32 = arith.constant dense<0.000000e+00> : vector<2x512xf32>
    %55 = tpu.matmul %52, %54, %cst_32 {dimension_numbers = #tpu.dot_dimension_numbers<[1], [0], [0], [1], [0, 0, 1, 1], [], []>} : vector<2x256xf32>, vector<256x512xf32>, vector<2x512xf32> -> vector<2x512xf32>
    %c1_33 = arith.constant 1 : index
    %c0_34 = arith.constant 0 : index
    %c0_35 = arith.constant 0 : index
    %56 = vector.load %arg4[%c1_33, %c0_34, %c0_35] : memref<2x1x512xf32, #tpu.memory_space<vmem>>, vector<1x1x512xf32>
    %57 = vector.shape_cast %56 : vector<1x1x512xf32> to vector<1x512xf32>
    %58 = vector.broadcast %57 : vector<1x512xf32> to vector<2x512xf32>
    %59 = arith.addf %55, %58 : vector<2x512xf32>
    %60 = vector.extract_strided_slice %59 {offsets = [0, 0], sizes = [2, 128], strides = [1, 1]} : vector<2x512xf32> to vector<2x128xf32>
    %61 = arith.negf %60 : vector<2x128xf32>
    %62 = math.exp %61 : vector<2x128xf32>
    %cst_36 = arith.constant 1.000000e+00 : f32
    %63 = vector.broadcast %cst_36 : f32 to vector<2x128xf32>
    %64 = arith.addf %63, %62 : vector<2x128xf32>
    %65 = arith.divf %63, %64 : vector<2x128xf32>
    %66 = vector.extract_strided_slice %59 {offsets = [0, 128], sizes = [2, 128], strides = [1, 1]} : vector<2x512xf32> to vector<2x128xf32>
    %67 = arith.negf %66 : vector<2x128xf32>
    %68 = math.exp %67 : vector<2x128xf32>
    %cst_37 = arith.constant 1.000000e+00 : f32
    %69 = vector.broadcast %cst_37 : f32 to vector<2x128xf32>
    %70 = arith.addf %69, %68 : vector<2x128xf32>
    %71 = arith.divf %69, %70 : vector<2x128xf32>
    %72 = vector.extract_strided_slice %59 {offsets = [0, 256], sizes = [2, 128], strides = [1, 1]} : vector<2x512xf32> to vector<2x128xf32>
    %73 = math.tanh %72 : vector<2x128xf32>
    %74 = vector.extract_strided_slice %59 {offsets = [0, 384], sizes = [2, 128], strides = [1, 1]} : vector<2x512xf32> to vector<2x128xf32>
    %75 = arith.negf %74 : vector<2x128xf32>
    %76 = math.exp %75 : vector<2x128xf32>
    %cst_38 = arith.constant 1.000000e+00 : f32
    %77 = vector.broadcast %cst_38 : f32 to vector<2x128xf32>
    %78 = arith.addf %77, %76 : vector<2x128xf32>
    %79 = arith.divf %77, %78 : vector<2x128xf32>
    %80 = arith.mulf %71, %51 : vector<2x128xf32>
    %81 = arith.mulf %65, %73 : vector<2x128xf32>
    %82 = arith.addf %80, %81 : vector<2x128xf32>
    %83 = math.tanh %82 : vector<2x128xf32>
    %84 = arith.mulf %79, %83 : vector<2x128xf32>
    %c1_39 = arith.constant 1 : index
    %c0_40 = arith.constant 0 : index
    %c0_41 = arith.constant 0 : index
    %85 = vector.load %arg12[%c1_39, %c0_40, %c0_41] : memref<2x2x128xf32, #tpu.memory_space<vmem>>, vector<1x2x128xf32>
    %86 = vector.shape_cast %85 : vector<1x2x128xf32> to vector<2x128xf32>
    %87 = vector.shape_cast %84 : vector<2x128xf32> to vector<1x2x128xf32>
    tpu.vector_store %arg12[%c1_39, %c0_40, %c0_41], %87 {strides = array<i32>} : memref<2x2x128xf32, #tpu.memory_space<vmem>>, vector<1x2x128xf32>,
    %c1_42 = arith.constant 1 : index
    %c0_43 = arith.constant 0 : index
    %c0_44 = arith.constant 0 : index
    %88 = vector.load %arg13[%c1_42, %c0_43, %c0_44] : memref<2x2x128xf32, #tpu.memory_space<vmem>>, vector<1x2x128xf32>
    %89 = vector.shape_cast %88 : vector<1x2x128xf32> to vector<2x128xf32>
    %90 = vector.shape_cast %82 : vector<2x128xf32> to vector<1x2x128xf32>
    tpu.vector_store %arg13[%c1_42, %c0_43, %c0_44], %90 {strides = array<i32>} : memref<2x2x128xf32, #tpu.memory_space<vmem>>, vector<1x2x128xf32>,
    %c0_45 = arith.constant 0 : index
    %c0_46 = arith.constant 0 : index
    %91 = vector.load %arg5[%c0_45, %c0_46] : memref<128x256xf32, #tpu.memory_space<vmem>>, vector<128x256xf32>
    %cst_47 = arith.constant dense<0.000000e+00> : vector<2x256xf32>
    %92 = tpu.matmul %84, %91, %cst_47 {dimension_numbers = #tpu.dot_dimension_numbers<[1], [0], [0], [1], [0, 0, 1, 1], [], []>} : vector<2x128xf32>, vector<128x256xf32>, vector<2x256xf32> -> vector<2x256xf32>
    %c0_48 = arith.constant 0 : index
    %c0_49 = arith.constant 0 : index
    %93 = vector.load %arg6[%c0_48, %c0_49] : memref<1x256xf32, #tpu.memory_space<vmem>>, vector<1x256xf32>
    %94 = vector.broadcast %93 : vector<1x256xf32> to vector<2x256xf32>
    %95 = arith.addf %92, %94 : vector<2x256xf32>
    %96 = vector.extract_strided_slice %95 {offsets = [0, 0], sizes = [2, 128], strides = [1, 1]} : vector<2x256xf32> to vector<2x128xf32>
    %97 = vector.extract_strided_slice %95 {offsets = [0, 128], sizes = [2, 128], strides = [1, 1]} : vector<2x256xf32> to vector<2x128xf32>
    %98 = tpu.iota {dimensions = array<i32: 1>} : vector<2x128xi32>
    %c8_i32 = arith.constant 8 : i32
    %99 = vector.broadcast %c8_i32 : i32 to vector<2x128xi32>
    %100 = arith.cmpi sge, %98, %99 : vector<2x128xi32>
    %cst_50 = arith.constant 5.000000e-01 : f32
    %101 = vector.broadcast %cst_50 : f32 to vector<2x128xf32>
    %102 = arith.mulf %101, %96 : vector<2x128xf32>
    %103 = math.exp %102 : vector<2x128xf32>
    %104 = arith.select %100, %103, %96 : vector<2x128xi1>, vector<2x128xf32>
    %c16_i32 = arith.constant 16 : i32
    %105 = vector.broadcast %c16_i32 : i32 to vector<2x128xi32>
    %106 = arith.cmpi sge, %98, %105 : vector<2x128xi32>
    %c24_i32 = arith.constant 24 : i32
    %107 = vector.broadcast %c24_i32 : i32 to vector<2x128xi32>
    %108 = arith.cmpi slt, %98, %107 : vector<2x128xi32>
    %109 = arith.andi %106, %108 : vector<2x128xi1>
    %c0_51 = arith.constant 0 : index
    %c0_52 = arith.constant 0 : index
    %c0_53 = arith.constant 0 : index
    %110 = vector.load %arg2[%c0_51, %c0_52, %c0_53] : memref<1x2x128xf32, #tpu.memory_space<vmem>>, vector<1x2x128xf32>
    %111 = vector.shape_cast %110 : vector<1x2x128xf32> to vector<2x128xf32>
    %112 = arith.mulf %111, %104 : vector<2x128xf32>
    %113 = arith.addf %112, %97 : vector<2x128xf32>
    %114 = arith.select %109, %113, %104 : vector<2x128xi1>, vector<2x128xf32>
    %c0_54 = arith.constant 0 : index
    %c0_55 = arith.constant 0 : index
    %c0_56 = arith.constant 0 : index
    %115 = vector.load %arg9[%c0_54, %c0_55, %c0_56] : memref<1x2x128xf32, #tpu.memory_space<vmem>>, vector<1x2x128xf32>
    %116 = vector.shape_cast %115 : vector<1x2x128xf32> to vector<2x128xf32>
    %117 = vector.shape_cast %114 : vector<2x128xf32> to vector<1x2x128xf32>
    tpu.vector_store %arg9[%c0_54, %c0_55, %c0_56], %117 {strides = array<i32>} : memref<1x2x128xf32, #tpu.memory_space<vmem>>, vector<1x2x128xf32>,
    %c7_i32 = arith.constant 7 : i32
    %118 = arith.cmpi eq, %arg0, %c7_i32 : i32
    %119 = arith.extui %118 : i1 to i32
    %c0_i32_57 = arith.constant 0 : i32
    %120 = arith.cmpi ne, %119, %c0_i32_57 : i32
    scf.if %120 {
      %c0_58 = arith.constant 0 : index
      %c0_59 = arith.constant 0 : index
      %c0_60 = arith.constant 0 : index
      %121 = vector.load %arg12[%c0_58, %c0_59, %c0_60] : memref<2x2x128xf32, #tpu.memory_space<vmem>>, vector<2x2x128xf32>
      %c0_61 = arith.constant 0 : index
      %c0_62 = arith.constant 0 : index
      %c0_63 = arith.constant 0 : index
      %122 = vector.load %arg10[%c0_61, %c0_62, %c0_63] : memref<2x2x128xf32, #tpu.memory_space<vmem>>, vector<2x2x128xf32>
      tpu.vector_store %arg10[%c0_61, %c0_62, %c0_63], %121 {strides = array<i32>} : memref<2x2x128xf32, #tpu.memory_space<vmem>>, vector<2x2x128xf32>,
      %c0_64 = arith.constant 0 : index
      %c0_65 = arith.constant 0 : index
      %c0_66 = arith.constant 0 : index
      %123 = vector.load %arg13[%c0_64, %c0_65, %c0_66] : memref<2x2x128xf32, #tpu.memory_space<vmem>>, vector<2x2x128xf32>
      %c0_67 = arith.constant 0 : index
      %c0_68 = arith.constant 0 : index
      %c0_69 = arith.constant 0 : index
      %124 = vector.load %arg11[%c0_67, %c0_68, %c0_69] : memref<2x2x128xf32, #tpu.memory_space<vmem>>, vector<2x2x128xf32>
      tpu.vector_store %arg11[%c0_67, %c0_68, %c0_69], %123 {strides = array<i32>} : memref<2x2x128xf32, #tpu.memory_space<vmem>>, vector<2x2x128xf32>,
    } else {
    }
    return
  }
  func.func @transform_0(%arg0: i32) -> (i32, i32, i32) {
    %c0_i32 = arith.constant 0 : i32
    %c0_i32_0 = arith.constant 0 : i32
    %c0_i32_1 = arith.constant 0 : i32
    return %arg0, %c0_i32, %c0_i32_0 : i32, i32, i32
  }
  func.func @transform_1(%arg0: i32) -> (i32, i32, i32) {
    %c0_i32 = arith.constant 0 : i32
    %c0_i32_0 = arith.constant 0 : i32
    %c0_i32_1 = arith.constant 0 : i32
    return %arg0, %c0_i32, %c0_i32_0 : i32, i32, i32
  }
  func.func @transform_2(%arg0: i32) -> (i32, i32, i32) {
    %c0_i32 = arith.constant 0 : i32
    %c0_i32_0 = arith.constant 0 : i32
    %c0_i32_1 = arith.constant 0 : i32
    %c0_i32_2 = arith.constant 0 : i32
    return %c0_i32, %c0_i32_0, %c0_i32_1 : i32, i32, i32
  }
  func.func @transform_3(%arg0: i32) -> (i32, i32, i32) {
    %c0_i32 = arith.constant 0 : i32
    %c0_i32_0 = arith.constant 0 : i32
    %c0_i32_1 = arith.constant 0 : i32
    %c0_i32_2 = arith.constant 0 : i32
    return %c0_i32, %c0_i32_0, %c0_i32_1 : i32, i32, i32
  }
  func.func @transform_4(%arg0: i32) -> (i32, i32) {
    %c0_i32 = arith.constant 0 : i32
    %c0_i32_0 = arith.constant 0 : i32
    %c0_i32_1 = arith.constant 0 : i32
    return %c0_i32, %c0_i32_0 : i32, i32
  }
  func.func @transform_5(%arg0: i32) -> (i32, i32) {
    %c0_i32 = arith.constant 0 : i32
    %c0_i32_0 = arith.constant 0 : i32
    %c0_i32_1 = arith.constant 0 : i32
    return %c0_i32, %c0_i32_0 : i32, i32
  }
  func.func @transform_6(%arg0: i32) -> (i32, i32, i32) {
    %c0_i32 = arith.constant 0 : i32
    %c0_i32_0 = arith.constant 0 : i32
    %c0_i32_1 = arith.constant 0 : i32
    %c0_i32_2 = arith.constant 0 : i32
    return %c0_i32, %c0_i32_0, %c0_i32_1 : i32, i32, i32
  }
  func.func @transform_7(%arg0: i32) -> (i32, i32, i32) {
    %c0_i32 = arith.constant 0 : i32
    %c0_i32_0 = arith.constant 0 : i32
    %c0_i32_1 = arith.constant 0 : i32
    %c0_i32_2 = arith.constant 0 : i32
    return %c0_i32, %c0_i32_0, %c0_i32_1 : i32, i32, i32
  }
  func.func @transform_8(%arg0: i32) -> (i32, i32, i32) {
    %c0_i32 = arith.constant 0 : i32
    %c0_i32_0 = arith.constant 0 : i32
    %c0_i32_1 = arith.constant 0 : i32
    return %arg0, %c0_i32, %c0_i32_0 : i32, i32, i32
  }
  func.func @transform_9(%arg0: i32) -> (i32, i32, i32) {
    %c0_i32 = arith.constant 0 : i32
    %c0_i32_0 = arith.constant 0 : i32
    %c0_i32_1 = arith.constant 0 : i32
    %c0_i32_2 = arith.constant 0 : i32
    return %c0_i32, %c0_i32_0, %c0_i32_1 : i32, i32, i32
  }
  func.func @transform_10(%arg0: i32) -> (i32, i32, i32) {
    %c0_i32 = arith.constant 0 : i32
    %c0_i32_0 = arith.constant 0 : i32
    %c0_i32_1 = arith.constant 0 : i32
    %c0_i32_2 = arith.constant 0 : i32
    return %c0_i32, %c0_i32_0, %c0_i32_1 : i32, i32, i32
  }
}

</mosaic_0001>

<llo_original>
// kernel: gaussian_lstm_forward.1
$region0: #{gaussian_lstm_forward.1}
  #allocation0 [shape = 'u32[]', space=smem, size = 0x4, offset = 0x4, fixed_abs, tag = 'smem constant byte address 0x4 - core index']
  #allocation1 [shape = 'u32[144,128]{1,0:T(1,128)}', space=vmem, size = 0x12000, scoped, tag = 'internal scratch']
  #allocation2 [shape = 'f32[2,2,128]{2,1,0:T(2,128)}', space=vmem, size = 0x800, scoped, tag = 'scratch operand']
  #allocation3 [shape = 'f32[2,2,128]{2,1,0:T(2,128)}', space=vmem, size = 0x800, scoped, tag = 'scratch operand']
  %s0 = inlined_call_operand.vmem [shape: f32[8,2,128], index: 0, kind: input, shape index: {}]
  %s1 = inlined_call_operand.vmem [shape: f32[8,2,128], index: 1, kind: input, shape index: {}]
  %s2 = inlined_call_operand.hbm [shape: f32[2,256,512], index: 2, kind: input, shape index: {}]
  %s3 = inlined_call_operand.vmem [shape: f32[2,1,512], index: 3, kind: input, shape index: {}]
  %s4 = inlined_call_operand.hbm [shape: f32[128,256], index: 4, kind: input, shape index: {}]
  %s5 = inlined_call_operand.vmem [shape: f32[1,256], index: 5, kind: input, shape index: {}]
  %s6 = inlined_call_operand.vmem [shape: f32[2,2,128], index: 6, kind: input, shape index: {}, may-alias: {6,9}]
  %s7 = inlined_call_operand.vmem [shape: f32[2,2,128], index: 7, kind: input, shape index: {}, may-alias: {7,10}]
  %s8 = inlined_call_operand.vmem [shape: f32[8,2,128], index: 8, kind: output, shape index: {0}]
  %s9 = inlined_call_operand.vmem [shape: f32[2,2,128], index: 9, kind: output, shape index: {1}, may-alias: {6,9}]
  %s10 = inlined_call_operand.vmem [shape: f32[2,2,128], index: 10, kind: output, shape index: {2}, may-alias: {7,10}]
  %11 = xla_tuple %s8, %s9, %s10
  %s12 = sld [smem:[#allocation0]]
  $region97: #{gaussian_lstm_forward.1} parent=0
    _
  %s14 = ssub.s32 1, %s12
  %s15 = scalar_select 0, %s14, %s12
  $region1: #{gaussian_lstm_forward.1} parent=0
    #allocation4 [shape = 'u8[1048576]{0}', space=vmem, size = 0x100000, scoped, tag = 'input window, operand 2, single buffered']
    #allocation5 [shape = 's32[2]{0}', space=sflag, size = 0x8, scoped, tag = 'scoped memory for gaussian_lstm_forward.1']
    #allocation6 [shape = 'u8[131072]{0}', space=vmem, size = 0x20000, scoped, tag = 'input window, operand 4, single buffered']
    #allocation7 [shape = 's32[1]{0}', space=sflag, size = 0x4, scoped, tag = 'scoped memory for gaussian_lstm_forward.1']
    %16 = vsyncpa [#allocation5], 0
    %17 = vsyncpa [#allocation7], 0
    loop: start=0, step=1, limit=10
    $region2: #{gaussian_lstm_forward.1} parent=1 // loop_pre_header
      _
    $region3: #{gaussian_lstm_forward.1} parent=1 // loop_header
      %s19 = sphi 0, %s23
      %p20 = scmp.ge.s32.totalorder %s19, 10
      %s29 = sphi 0, %s31
      %s32 = sphi 0, %s29
      %s33 = sphi 0, %s32
      %s49 = sphi 0, %s33
      %s55 = sphi 0, %s57
      %s58 = sphi 0, %s55
      %s59 = sphi 0, %s58
      %s75 = sphi 0, %s59
      %s79 = sphi 0, %s79
      %s81 = sphi 0, %s79
      %s82 = sphi 0, %s81
      %s96 = sphi 0, %s82
      %s100 = sphi 0, %s100
      %s102 = sphi 0, %s100
      %s103 = sphi 0, %s102
      %s117 = sphi 0, %s103
      %s121 = sphi 0, %s121
      %s123 = sphi 0, %s121
      %s124 = sphi 0, %s123
      %s138 = sphi 0, %s124
      %s142 = sphi 0, %s142
      %s144 = sphi 0, %s142
      %s145 = sphi 0, %s144
      %s159 = sphi 0, %s145
      %s163 = sphi 0, %s163
      %s165 = sphi 0, %s163
      %s166 = sphi 0, %s165
      %s180 = sphi 0, %s166
      %s184 = sphi 0, %s184
      %s186 = sphi 0, %s184
      %s187 = sphi 0, %s186
      %s201 = sphi 0, %s187
      %s207 = sphi 0, %s209
      %s210 = sphi 0, %s207
      %s211 = sphi 0, %s210
      %s227 = sphi 0, %s211
      %s231 = sphi 0, %s231
      %s233 = sphi 0, %s231
      %s234 = sphi 0, %s233
      %s248 = sphi 0, %s234
      %s252 = sphi 0, %s252
      %s254 = sphi 0, %s252
      %s255 = sphi 0, %s254
      %s269 = sphi 0, %s255
    $region4: #{gaussian_lstm_forward.1} parent=1 // loop_header_branch
      %22 = sbr.rel (%p20) target = $region8
    $region5: #{gaussian_lstm_forward.1} parent=1 // loop_body
      %s24 = ssub.s32 %s19, 1
      %s25 = ssub.s32 %s19, 2
      %s26 = sadd.s32 %s19, 1
      %s27 = ssub.s32 %s19, %s26
      %p28 = scmp.eq.s32.totalorder %s27, 0
      %s30 = sadd.s32 %s29, 1
      %s31 = scalar_select %p28, %s29, %s30
      %p34 = pneg %p28
      %p35 = scmp.eq.s32.totalorder %s19, 7
      %p36 = por %p34, %p35
      %p37 = scmp.ne.s32.totalorder %s29, %s32
      %p38 = scmp.eq.s32.totalorder %s19, 0
      %p39 = por %p37, %p38
      %p40 = scmp.ne.s32.totalorder %s29, %s32
      %p41 = scmp.eq.s32.totalorder %s24, 7
      %p42 = por %p40, %p41
      %p43 = scmp.ne.s32.totalorder %s32, %s33
      %p44 = scmp.eq.s32.totalorder %s24, 0
      %p45 = por %p43, %p44
      %p46 = scmp.ne.s32.totalorder %s32, %s33
      %p47 = scmp.eq.s32.totalorder %s25, 7
      %p48 = por %p46, %p47
      %p50 = scmp.ne.s32.totalorder %s33, %s49
      %p51 = scmp.eq.s32.totalorder %s25, 0
      %p52 = por %p50, %p51
      %s53 = ssub.s32 %s19, %s26
      %p54 = scmp.eq.s32.totalorder %s53, 0
      %s56 = sadd.s32 %s55, 1
      %s57 = scalar_select %p54, %s55, %s56
      %p60 = pneg %p54
      %p61 = scmp.eq.s32.totalorder %s19, 7
      %p62 = por %p60, %p61
      %p63 = scmp.ne.s32.totalorder %s55, %s58
      %p64 = scmp.eq.s32.totalorder %s19, 0
      %p65 = por %p63, %p64
      %p66 = scmp.ne.s32.totalorder %s55, %s58
      %p67 = scmp.eq.s32.totalorder %s24, 7
      %p68 = por %p66, %p67
      %p69 = scmp.ne.s32.totalorder %s58, %s59
      %p70 = scmp.eq.s32.totalorder %s24, 0
      %p71 = por %p69, %p70
      %p72 = scmp.ne.s32.totalorder %s58, %s59
      %p73 = scmp.eq.s32.totalorder %s25, 7
      %p74 = por %p72, %p73
      %p76 = scmp.ne.s32.totalorder %s59, %s75
      %p77 = scmp.eq.s32.totalorder %s25, 0
      %p78 = por %p76, %p77
      %s80 = sadd.s32 %s79, 1
      %p83 = scmp.eq.s32.totalorder %s19, 7
      %p84 = scmp.ne.s32.totalorder %s79, %s81
      %p85 = scmp.eq.s32.totalorder %s19, 0
      %p86 = por %p84, %p85
      %p87 = scmp.ne.s32.totalorder %s79, %s81
      %p88 = scmp.eq.s32.totalorder %s24, 7
      %p89 = por %p87, %p88
      %p90 = scmp.ne.s32.totalorder %s81, %s82
      %p91 = scmp.eq.s32.totalorder %s24, 0
      %p92 = por %p90, %p91
      %p93 = scmp.ne.s32.totalorder %s81, %s82
      %p94 = scmp.eq.s32.totalorder %s25, 7
      %p95 = por %p93, %p94
      %p97 = scmp.ne.s32.totalorder %s82, %s96
      %p98 = scmp.eq.s32.totalorder %s25, 0
      %p99 = por %p97, %p98
      %s101 = sadd.s32 %s100, 1
      %p104 = scmp.eq.s32.totalorder %s19, 7
      %p105 = scmp.ne.s32.totalorder %s100, %s102
      %p106 = scmp.eq.s32.totalorder %s19, 0
      %p107 = por %p105, %p106
      %p108 = scmp.ne.s32.totalorder %s100, %s102
      %p109 = scmp.eq.s32.totalorder %s24, 7
      %p110 = por %p108, %p109
      %p111 = scmp.ne.s32.totalorder %s102, %s103
      %p112 = scmp.eq.s32.totalorder %s24, 0
      %p113 = por %p111, %p112
      %p114 = scmp.ne.s32.totalorder %s102, %s103
      %p115 = scmp.eq.s32.totalorder %s25, 7
      %p116 = por %p114, %p115
      %p118 = scmp.ne.s32.totalorder %s103, %s117
      %p119 = scmp.eq.s32.totalorder %s25, 0
      %p120 = por %p118, %p119
      %s122 = sadd.s32 %s121, 1
      %p125 = scmp.eq.s32.totalorder %s19, 7
      %p126 = scmp.ne.s32.totalorder %s121, %s123
      %p127 = scmp.eq.s32.totalorder %s19, 0
      %p128 = por %p126, %p127
      %p129 = scmp.ne.s32.totalorder %s121, %s123
      %p130 = scmp.eq.s32.totalorder %s24, 7
      %p131 = por %p129, %p130
      %p132 = scmp.ne.s32.totalorder %s123, %s124
      %p133 = scmp.eq.s32.totalorder %s24, 0
      %p134 = por %p132, %p133
      %p135 = scmp.ne.s32.totalorder %s123, %s124
      %p136 = scmp.eq.s32.totalorder %s25, 7
      %p137 = por %p135, %p136
      %p139 = scmp.ne.s32.totalorder %s124, %s138
      %p140 = scmp.eq.s32.totalorder %s25, 0
      %p141 = por %p139, %p140
      %s143 = sadd.s32 %s142, 1
      %p146 = scmp.eq.s32.totalorder %s19, 7
      %p147 = scmp.ne.s32.totalorder %s142, %s144
      %p148 = scmp.eq.s32.totalorder %s19, 0
      %p149 = por %p147, %p148
      %p150 = scmp.ne.s32.totalorder %s142, %s144
      %p151 = scmp.eq.s32.totalorder %s24, 7
      %p152 = por %p150, %p151
      %p153 = scmp.ne.s32.totalorder %s144, %s145
      %p154 = scmp.eq.s32.totalorder %s24, 0
      %p155 = por %p153, %p154
      %p156 = scmp.ne.s32.totalorder %s144, %s145
      %p157 = scmp.eq.s32.totalorder %s25, 7
      %p158 = por %p156, %p157
      %p160 = scmp.ne.s32.totalorder %s145, %s159
      %p161 = scmp.eq.s32.totalorder %s25, 0
      %p162 = por %p160, %p161
      %s164 = sadd.s32 %s163, 1
      %p167 = scmp.eq.s32.totalorder %s19, 7
      %p168 = scmp.ne.s32.totalorder %s163, %s165
      %p169 = scmp.eq.s32.totalorder %s19, 0
      %p170 = por %p168, %p169
      %p171 = scmp.ne.s32.totalorder %s163, %s165
      %p172 = scmp.eq.s32.totalorder %s24, 7
      %p173 = por %p171, %p172
      %p174 = scmp.ne.s32.totalorder %s165, %s166
      %p175 = scmp.eq.s32.totalorder %s24, 0
      %p176 = por %p174, %p175
      %p177 = scmp.ne.s32.totalorder %s165, %s166
      %p178 = scmp.eq.s32.totalorder %s25, 7
      %p179 = por %p177, %p178
      %p181 = scmp.ne.s32.totalorder %s166, %s180
      %p182 = scmp.eq.s32.totalorder %s25, 0
      %p183 = por %p181, %p182
      %s185 = sadd.s32 %s184, 1
      %p188 = scmp.eq.s32.totalorder %s19, 7
      %p189 = scmp.ne.s32.totalorder %s184, %s186
      %p190 = scmp.eq.s32.totalorder %s19, 0
      %p191 = por %p189, %p190
      %p192 = scmp.ne.s32.totalorder %s184, %s186
      %p193 = scmp.eq.s32.totalorder %s24, 7
      %p194 = por %p192, %p193
      %p195 = scmp.ne.s32.totalorder %s186, %s187
      %p196 = scmp.eq.s32.totalorder %s24, 0
      %p197 = por %p195, %p196
      %p198 = scmp.ne.s32.totalorder %s186, %s187
      %p199 = scmp.eq.s32.totalorder %s25, 7
      %p200 = por %p198, %p199
      %p202 = scmp.ne.s32.totalorder %s187, %s201
      %p203 = scmp.eq.s32.totalorder %s25, 0
      %p204 = por %p202, %p203
      %s205 = ssub.s32 %s19, %s26
      %p206 = scmp.eq.s32.totalorder %s205, 0
      %s208 = sadd.s32 %s207, 1
      %s209 = scalar_select %p206, %s207, %s208
      %p212 = pneg %p206
      %p213 = scmp.eq.s32.totalorder %s19, 7
      %p214 = por %p212, %p213
      %p215 = scmp.ne.s32.totalorder %s207, %s210
      %p216 = scmp.eq.s32.totalorder %s19, 0
      %p217 = por %p215, %p216
      %p218 = scmp.ne.s32.totalorder %s207, %s210
      %p219 = scmp.eq.s32.totalorder %s24, 7
      %p220 = por %p218, %p219
      %p221 = scmp.ne.s32.totalorder %s210, %s211
      %p222 = scmp.eq.s32.totalorder %s24, 0
      %p223 = por %p221, %p222
      %p224 = scmp.ne.s32.totalorder %s210, %s211
      %p225 = scmp.eq.s32.totalorder %s25, 7
      %p226 = por %p224, %p225
      %p228 = scmp.ne.s32.totalorder %s211, %s227
      %p229 = scmp.eq.s32.totalorder %s25, 0
      %p230 = por %p228, %p229
      %s232 = sadd.s32 %s231, 1
      %p235 = scmp.eq.s32.totalorder %s19, 7
      %p236 = scmp.ne.s32.totalorder %s231, %s233
      %p237 = scmp.eq.s32.totalorder %s19, 0
      %p238 = por %p236, %p237
      %p239 = scmp.ne.s32.totalorder %s231, %s233
      %p240 = scmp.eq.s32.totalorder %s24, 7
      %p241 = por %p239, %p240
      %p242 = scmp.ne.s32.totalorder %s233, %s234
      %p243 = scmp.eq.s32.totalorder %s24, 0
      %p244 = por %p242, %p243
      %p245 = scmp.ne.s32.totalorder %s233, %s234
      %p246 = scmp.eq.s32.totalorder %s25, 7
      %p247 = por %p245, %p246
      %p249 = scmp.ne.s32.totalorder %s234, %s248
      %p250 = scmp.eq.s32.totalorder %s25, 0
      %p251 = por %p249, %p250
      %s253 = sadd.s32 %s252, 1
      %p256 = scmp.eq.s32.totalorder %s19, 7
      %p257 = scmp.ne.s32.totalorder %s252, %s254
      %p258 = scmp.eq.s32.totalorder %s19, 0
      %p259 = por %p257, %p258
      %p260 = scmp.ne.s32.totalorder %s252, %s254
      %p261 = scmp.eq.s32.totalorder %s24, 7
      %p262 = por %p260, %p261
      %p263 = scmp.ne.s32.totalorder %s254, %s255
      %p264 = scmp.eq.s32.totalorder %s24, 0
      %p265 = por %p263, %p264
      %p266 = scmp.ne.s32.totalorder %s254, %s255
      %p267 = scmp.eq.s32.totalorder %s25, 7
      %p268 = por %p266, %p267
      %p270 = scmp.ne.s32.totalorder %s255, %s269
      %p271 = scmp.eq.s32.totalorder %s25, 0
      %p272 = por %p270, %p271
      %p273 = scmp.le.s32.totalorder 1, %s19
      %p274 = scmp.lt.s32.totalorder %s19, 9
      %p275 = pnand %p273, %p274
      %p276 = pneg %p275
      // Predicated region
      $region9: #{gaussian_lstm_forward.1} parent=5 // pred_check
        _
      $region10: #{gaussian_lstm_forward.1} parent=5 // pred_check_branch
        %278 = sbr.rel (%p275) target = $region12
      $region11: #{gaussian_lstm_forward.1} parent=5 // pred_region
        %s279 = ssub.s32 %s19, 1
        // Predicated region
        $region13: #{gaussian_lstm_forward.1} parent=11 // pred_check
          %p280 = pneg %p92
        $region14: #{gaussian_lstm_forward.1} parent=11 // pred_check_branch
          %282 = sbr.rel (%p280) target = $region16
        $region15: #{gaussian_lstm_forward.1} parent=11 // pred_region
          %s284 = ssub.s32 32768, 32768
          %285 = vsyncadd [#allocation5], %s284
          %s286 = sshll.u32 [#allocation4], 4
          %s287 = int_to_ptr.vmem [resolvable:$true] %s286
          %292 = dma.hbm_to_vmem [thread:$0]  %s2, 32768, %s287, [#allocation5], 512, 512, 32
        $region16: #{gaussian_lstm_forward.1} parent=11 // pred_fallthru
          _
        // Predicated region
        $region17: #{gaussian_lstm_forward.1} parent=11 // pred_check
          %p293 = pneg %p113
        $region18: #{gaussian_lstm_forward.1} parent=11 // pred_check_branch
          %295 = sbr.rel (%p293) target = $region20
        $region19: #{gaussian_lstm_forward.1} parent=11 // pred_region
          _
        $region20: #{gaussian_lstm_forward.1} parent=11 // pred_fallthru
          _
        // Predicated region
        $region21: #{gaussian_lstm_forward.1} parent=11 // pred_check
          %p296 = pneg %p134
        $region22: #{gaussian_lstm_forward.1} parent=11 // pred_check_branch
          %298 = sbr.rel (%p296) target = $region24
        $region23: #{gaussian_lstm_forward.1} parent=11 // pred_region
          %s300 = ssub.s32 4096, 4096
          %301 = vsyncadd [#allocation7], %s300
          %s302 = sshll.u32 [#allocation6], 4
          %s303 = int_to_ptr.vmem [resolvable:$true] %s302
          %308 = dma.hbm_to_vmem [thread:$0]  %s4, 4096, %s303, [#allocation7], 256, 256, 16
        $region24: #{gaussian_lstm_forward.1} parent=11 // pred_fallthru
          _
        // Predicated region
        $region25: #{gaussian_lstm_forward.1} parent=11 // pred_check
          %p309 = pneg %p155
        $region26: #{gaussian_lstm_forward.1} parent=11 // pred_check_branch
          %311 = sbr.rel (%p309) target = $region28
        $region27: #{gaussian_lstm_forward.1} parent=11 // pred_region
          _
        $region28: #{gaussian_lstm_forward.1} parent=11 // pred_fallthru
          _
        // Predicated region
        $region29: #{gaussian_lstm_forward.1} parent=11 // pred_check
          %p312 = pneg %p176
        $region30: #{gaussian_lstm_forward.1} parent=11 // pred_check_branch
          %314 = sbr.rel (%p312) target = $region32
        $region31: #{gaussian_lstm_forward.1} parent=11 // pred_region
          _
        $region32: #{gaussian_lstm_forward.1} parent=11 // pred_fallthru
          _
        // Predicated region
        $region33: #{gaussian_lstm_forward.1} parent=11 // pred_check
          %p315 = pneg %p197
        $region34: #{gaussian_lstm_forward.1} parent=11 // pred_check_branch
          %317 = sbr.rel (%p315) target = $region36
        $region35: #{gaussian_lstm_forward.1} parent=11 // pred_region
          _
        $region36: #{gaussian_lstm_forward.1} parent=11 // pred_fallthru
          _
      $region12: #{gaussian_lstm_forward.1} parent=5 // pred_fallthru
        _
      %p318 = scmp.lt.s32.totalorder %s19, 8
      // Predicated region
      $region37: #{gaussian_lstm_forward.1} parent=5 // pred_check
        %p319 = pneg %p318
      $region38: #{gaussian_lstm_forward.1} parent=5 // pred_check_branch
        %321 = sbr.rel (%p319) target = $region40
      $region39: #{gaussian_lstm_forward.1} parent=5 // pred_region
        // Predicated region
        $region41: #{gaussian_lstm_forward.1} parent=39 // pred_check
          %p322 = pneg %p39
        $region42: #{gaussian_lstm_forward.1} parent=39 // pred_check_branch
          %324 = sbr.rel (%p322) target = $region44
        $region43: #{gaussian_lstm_forward.1} parent=39 // pred_region
          %p325 = scmp.lt.s32.totalorder %s19, 7
          %s326 = scalar_select %p325, %s19, 7
          %s327 = smul.addr %s326, 2
          %s328 = scalar_lea.vmem %s0, %s327
        $region44: #{gaussian_lstm_forward.1} parent=39 // pred_fallthru
          _
        // Predicated region
        $region45: #{gaussian_lstm_forward.1} parent=39 // pred_check
          %p329 = pneg %p65
        $region46: #{gaussian_lstm_forward.1} parent=39 // pred_check_branch
          %331 = sbr.rel (%p329) target = $region48
        $region47: #{gaussian_lstm_forward.1} parent=39 // pred_region
          %p332 = scmp.lt.s32.totalorder %s19, 7
          %s333 = scalar_select %p332, %s19, 7
          %s334 = smul.addr %s333, 2
          %s335 = scalar_lea.vmem %s1, %s334
        $region48: #{gaussian_lstm_forward.1} parent=39 // pred_fallthru
          _
      $region40: #{gaussian_lstm_forward.1} parent=5 // pred_fallthru
        _
      %p336 = scmp.le.s32.totalorder 1, %s19
      %p337 = scmp.lt.s32.totalorder %s19, 9
      %p338 = pnand %p336, %p337
      %p339 = pneg %p338
      // Predicated region
      $region49: #{gaussian_lstm_forward.1} parent=5 // pred_check
        _
      $region50: #{gaussian_lstm_forward.1} parent=5 // pred_check_branch
        %341 = sbr.rel (%p338) target = $region52
      $region51: #{gaussian_lstm_forward.1} parent=5 // pred_region
        %s342 = ssub.s32 %s19, 1
        // Predicated region
        $region53: #{gaussian_lstm_forward.1} parent=51 // pred_check
          %p343 = pneg %p92
        $region54: #{gaussian_lstm_forward.1} parent=51 // pred_check_branch
          %345 = sbr.rel (%p343) target = $region56
        $region55: #{gaussian_lstm_forward.1} parent=51 // pred_region
          %346 = dma.done [#allocation5], 32768
        $region56: #{gaussian_lstm_forward.1} parent=51 // pred_fallthru
          _
        // Predicated region
        $region57: #{gaussian_lstm_forward.1} parent=51 // pred_check
          %p347 = pneg %p134
        $region58: #{gaussian_lstm_forward.1} parent=51 // pred_check_branch
          %349 = sbr.rel (%p347) target = $region60
        $region59: #{gaussian_lstm_forward.1} parent=51 // pred_region
          %350 = dma.done [#allocation7], 4096
        $region60: #{gaussian_lstm_forward.1} parent=51 // pred_fallthru
          _
        %p351 = scmp.lt.s32.totalorder %s24, 7
        %s352 = scalar_select %p351, %s24, 7
        %s353 = smul.addr %s352, 2
        %s354 = scalar_lea.vmem %s0, %s353
        %p355 = pneg %p45
        %p356 = pneg %p42
        %p357 = scmp.lt.s32.totalorder %s24, 7
        %s358 = scalar_select %p357, %s24, 7
        %s359 = smul.addr %s358, 2
        %s360 = scalar_lea.vmem %s1, %s359
        %p361 = pneg %p71
        %p362 = pneg %p68
        %p363 = pneg %p92
        %p364 = pneg %p89
        %p365 = pneg %p113
        %p366 = pneg %p110
        %p367 = pneg %p134
        %p368 = pneg %p131
        %p369 = pneg %p155
        %p370 = pneg %p152
        %p371 = pneg %p176
        %p372 = pneg %p173
        %p373 = pneg %p197
        %p374 = pneg %p194
        %p375 = pneg %p223
        %p376 = pneg %p220
        %p377 = scmp.lt.s32.totalorder %s24, 7
        %s378 = scalar_select %p377, %s24, 7
        %s379 = smul.addr %s378, 2
        %s380 = scalar_lea.vmem %s8, %s379
        %p381 = pneg %p244
        %p382 = pneg %p241
        %p383 = pneg %p265
        %p384 = pneg %p262
        %p385 = scmp.lt.s32.totalorder %s24, 7
        %s386 = scalar_select %p385, %s24, 7
        %s387 = smul.addr %s386, 2
        %s388 = scalar_lea.vmem %s0, %s387
        %p389 = scmp.lt.s32.totalorder %s24, 7
        %s390 = scalar_select %p389, %s24, 7
        %s391 = smul.addr %s390, 2
        %s392 = scalar_lea.vmem %s1, %s391
        %p393 = scmp.lt.s32.totalorder %s24, 7
        %s394 = scalar_select %p393, %s24, 7
        %s395 = smul.addr %s394, 2
        %s396 = scalar_lea.vmem %s8, %s395
        %p397 = scmp.eq.s32.totalorder %s24, 0
        // Predicated region
        $region61: #{gaussian_lstm_forward.1} parent=51 // pred_check
          %p398 = pneg %p397
        $region62: #{gaussian_lstm_forward.1} parent=51 // pred_check_branch
          %400 = sbr.rel (%p398) target = $region64
        $region63: #{gaussian_lstm_forward.1} parent=51 // pred_region
          %v401 = vld [vmem:[%s6] sm:$0x3]
          %v402 = vld [vmem:[%s6 + $0x2] sm:$0x3]
          %403 = vst [vmem:[#allocation2] sm:$0x3] %v401
          %404 = vst [vmem:[#allocation2 + $0x2] sm:$0x3] %v402
          %v405 = vld [vmem:[%s7] sm:$0x3]
          %v406 = vld [vmem:[%s7 + $0x2] sm:$0x3]
          %407 = vst [vmem:[#allocation3] sm:$0x3] %v405
          %408 = vst [vmem:[#allocation3 + $0x2] sm:$0x3] %v406
        $region64: #{gaussian_lstm_forward.1} parent=51 // pred_fallthru
          _
        %v409 = vld [vmem:[%s388] sm:$0x3]
        %v410 = vld [vmem:[#allocation2] sm:$0x3]
        %v411 = vld [vmem:[#allocation3] sm:$0x3]
        %v412 = vld [vmem:[#allocation4] sm:$0xff]
        %v413 = vld [vmem:[#allocation4 + $0x8] sm:$0xff]
        %v414 = vld [vmem:[#allocation4 + $0x10] sm:$0xff]
        %v415 = vld [vmem:[#allocation4 + $0x18] sm:$0xff]
        %v416 = vld [vmem:[#allocation4 + $0x20] sm:$0xff]
        %v417 = vld [vmem:[#allocation4 + $0x28] sm:$0xff]
        %v418 = vld [vmem:[#allocation4 + $0x30] sm:$0xff]
        %v419 = vld [vmem:[#allocation4 + $0x38] sm:$0xff]
        %v420 = vld [vmem:[#allocation4 + $0x40] sm:$0xff]
        %v421 = vld [vmem:[#allocation4 + $0x48] sm:$0xff]
        %v422 = vld [vmem:[#allocation4 + $0x50] sm:$0xff]
        %v423 = vld [vmem:[#allocation4 + $0x58] sm:$0xff]
        %v424 = vld [vmem:[#allocation4 + $0x60] sm:$0xff]
        %v425 = vld [vmem:[#allocation4 + $0x68] sm:$0xff]
        %v426 = vld [vmem:[#allocation4 + $0x70] sm:$0xff]
        %v427 = vld [vmem:[#allocation4 + $0x78] sm:$0xff]
        %v428 = vld [vmem:[#allocation4 + $0x80] sm:$0xff]
        %v429 = vld [vmem:[#allocation4 + $0x88] sm:$0xff]
        %v430 = vld [vmem:[#allocation4 + $0x90] sm:$0xff]
        %v431 = vld [vmem:[#allocation4 + $0x98] sm:$0xff]
        %v432 = vld [vmem:[#allocation4 + $0xa0] sm:$0xff]
        %v433 = vld [vmem:[#allocation4 + $0xa8] sm:$0xff]
        %v434 = vld [vmem:[#allocation4 + $0xb0] sm:$0xff]
        %v435 = vld [vmem:[#allocation4 + $0xb8] sm:$0xff]
        %v436 = vld [vmem:[#allocation4 + $0xc0] sm:$0xff]
        %v437 = vld [vmem:[#allocation4 + $0xc8] sm:$0xff]
        %v438 = vld [vmem:[#allocation4 + $0xd0] sm:$0xff]
        %v439 = vld [vmem:[#allocation4 + $0xd8] sm:$0xff]
        %v440 = vld [vmem:[#allocation4 + $0xe0] sm:$0xff]
        %v441 = vld [vmem:[#allocation4 + $0xe8] sm:$0xff]
        %v442 = vld [vmem:[#allocation4 + $0xf0] sm:$0xff]
        %v443 = vld [vmem:[#allocation4 + $0xf8] sm:$0xff]
        %v444 = vld [vmem:[#allocation4 + $0x100] sm:$0xff]
        %v445 = vld [vmem:[#allocation4 + $0x108] sm:$0xff]
        %v446 = vld [vmem:[#allocation4 + $0x110] sm:$0xff]
        %v447 = vld [vmem:[#allocation4 + $0x118] sm:$0xff]
        %v448 = vld [vmem:[#allocation4 + $0x120] sm:$0xff]
        %v449 = vld [vmem:[#allocation4 + $0x128] sm:$0xff]
        %v450 = vld [vmem:[#allocation4 + $0x130] sm:$0xff]
        %v451 = vld [vmem:[#allocation4 + $0x138] sm:$0xff]
        %v452 = vld [vmem:[#allocation4 + $0x140] sm:$0xff]
        %v453 = vld [vmem:[#allocation4 + $0x148] sm:$0xff]
        %v454 = vld [vmem:[#allocation4 + $0x150] sm:$0xff]
        %v455 = vld [vmem:[#allocation4 + $0x158] sm:$0xff]
        %v456 = vld [vmem:[#allocation4 + $0x160] sm:$0xff]
        %v457 = vld [vmem:[#allocation4 + $0x168] sm:$0xff]
        %v458 = vld [vmem:[#allocation4 + $0x170] sm:$0xff]
        %v459 = vld [vmem:[#allocation4 + $0x178] sm:$0xff]
        %v460 = vld [vmem:[#allocation4 + $0x180] sm:$0xff]
        %v461 = vld [vmem:[#allocation4 + $0x188] sm:$0xff]
        %v462 = vld [vmem:[#allocation4 + $0x190] sm:$0xff]
        %v463 = vld [vmem:[#allocation4 + $0x198] sm:$0xff]
        %v464 = vld [vmem:[#allocation4 + $0x1a0] sm:$0xff]
        %v465 = vld [vmem:[#allocation4 + $0x1a8] sm:$0xff]
        %v466 = vld [vmem:[#allocation4 + $0x1b0] sm:$0xff]
        %v467 = vld [vmem:[#allocation4 + $0x1b8] sm:$0xff]
        %v468 = vld [vmem:[#allocation4 + $0x1c0] sm:$0xff]
        %v469 = vld [vmem:[#allocation4 + $0x1c8] sm:$0xff]
        %v470 = vld [vmem:[#allocation4 + $0x1d0] sm:$0xff]
        %v471 = vld [vmem:[#allocation4 + $0x1d8] sm:$0xff]
        %v472 = vld [vmem:[#allocation4 + $0x1e0] sm:$0xff]
        %v473 = vld [vmem:[#allocation4 + $0x1e8] sm:$0xff]
        %v474 = vld [vmem:[#allocation4 + $0x1f0] sm:$0xff]
        %v475 = vld [vmem:[#allocation4 + $0x1f8] sm:$0xff]
        %v476 = vld [vmem:[#allocation4 + $0x200] sm:$0xff]
        %v477 = vld [vmem:[#allocation4 + $0x208] sm:$0xff]
        %v478 = vld [vmem:[#allocation4 + $0x210] sm:$0xff]
        %v479 = vld [vmem:[#allocation4 + $0x218] sm:$0xff]
        %v480 = vld [vmem:[#allocation4 + $0x220] sm:$0xff]
        %v481 = vld [vmem:[#allocation4 + $0x228] sm:$0xff]
        %v482 = vld [vmem:[#allocation4 + $0x230] sm:$0xff]
        %v483 = vld [vmem:[#allocation4 + $0x238] sm:$0xff]
        %v484 = vld [vmem:[#allocation4 + $0x240] sm:$0xff]
        %v485 = vld [vmem:[#allocation4 + $0x248] sm:$0xff]
        %v486 = vld [vmem:[#allocation4 + $0x250] sm:$0xff]
        %v487 = vld [vmem:[#allocation4 + $0x258] sm:$0xff]
        %v488 = vld [vmem:[#allocation4 + $0x260] sm:$0xff]
        %v489 = vld [vmem:[#allocation4 + $0x268] sm:$0xff]
        %v490 = vld [vmem:[#allocation4 + $0x270] sm:$0xff]
        %v491 = vld [vmem:[#allocation4 + $0x278] sm:$0xff]
        %v492 = vld [vmem:[#allocation4 + $0x280] sm:$0xff]
        %v493 = vld [vmem:[#allocation4 + $0x288] sm:$0xff]
        %v494 = vld [vmem:[#allocation4 + $0x290] sm:$0xff]
        %v495 = vld [vmem:[#allocation4 + $0x298] sm:$0xff]
        %v496 = vld [vmem:[#allocation4 + $0x2a0] sm:$0xff]
        %v497 = vld [vmem:[#allocation4 + $0x2a8] sm:$0xff]
        %v498 = vld [vmem:[#allocation4 + $0x2b0] sm:$0xff]
        %v499 = vld [vmem:[#allocation4 + $0x2b8] sm:$0xff]
        %v500 = vld [vmem:[#allocation4 + $0x2c0] sm:$0xff]
        %v501 = vld [vmem:[#allocation4 + $0x2c8] sm:$0xff]
        %v502 = vld [vmem:[#allocation4 + $0x2d0] sm:$0xff]
        %v503 = vld [vmem:[#allocation4 + $0x2d8] sm:$0xff]
        %v504 = vld [vmem:[#allocation4 + $0x2e0] sm:$0xff]
        %v505 = vld [vmem:[#allocation4 + $0x2e8] sm:$0xff]
        %v506 = vld [vmem:[#allocation4 + $0x2f0] sm:$0xff]
        %v507 = vld [vmem:[#allocation4 + $0x2f8] sm:$0xff]
        %v508 = vld [vmem:[#allocation4 + $0x300] sm:$0xff]
        %v509 = vld [vmem:[#allocation4 + $0x308] sm:$0xff]
        %v510 = vld [vmem:[#allocation4 + $0x310] sm:$0xff]
        %v511 = vld [vmem:[#allocation4 + $0x318] sm:$0xff]
        %v512 = vld [vmem:[#allocation4 + $0x320] sm:$0xff]
        %v513 = vld [vmem:[#allocation4 + $0x328] sm:$0xff]
        %v514 = vld [vmem:[#allocation4 + $0x330] sm:$0xff]
        %v515 = vld [vmem:[#allocation4 + $0x338] sm:$0xff]
        %v516 = vld [vmem:[#allocation4 + $0x340] sm:$0xff]
        %v517 = vld [vmem:[#allocation4 + $0x348] sm:$0xff]
        %v518 = vld [vmem:[#allocation4 + $0x350] sm:$0xff]
        %v519 = vld [vmem:[#allocation4 + $0x358] sm:$0xff]
        %v520 = vld [vmem:[#allocation4 + $0x360] sm:$0xff]
        %v521 = vld [vmem:[#allocation4 + $0x368] sm:$0xff]
        %v522 = vld [vmem:[#allocation4 + $0x370] sm:$0xff]
        %v523 = vld [vmem:[#allocation4 + $0x378] sm:$0xff]
        %v524 = vld [vmem:[#allocation4 + $0x380] sm:$0xff]
        %v525 = vld [vmem:[#allocation4 + $0x388] sm:$0xff]
        %v526 = vld [vmem:[#allocation4 + $0x390] sm:$0xff]
        %v527 = vld [vmem:[#allocation4 + $0x398] sm:$0xff]
        %v528 = vld [vmem:[#allocation4 + $0x3a0] sm:$0xff]
        %v529 = vld [vmem:[#allocation4 + $0x3a8] sm:$0xff]
        %v530 = vld [vmem:[#allocation4 + $0x3b0] sm:$0xff]
        %v531 = vld [vmem:[#allocation4 + $0x3b8] sm:$0xff]
        %v532 = vld [vmem:[#allocation4 + $0x3c0] sm:$0xff]
        %v533 = vld [vmem:[#allocation4 + $0x3c8] sm:$0xff]
        %v534 = vld [vmem:[#allocation4 + $0x3d0] sm:$0xff]
        %v535 = vld [vmem:[#allocation4 + $0x3d8] sm:$0xff]
        %v536 = vld [vmem:[#allocation4 + $0x3e0] sm:$0xff]
        %v537 = vld [vmem:[#allocation4 + $0x3e8] sm:$0xff]
        %v538 = vld [vmem:[#allocation4 + $0x3f0] sm:$0xff]
        %v539 = vld [vmem:[#allocation4 + $0x3f8] sm:$0xff]
        %v540 = vld [vmem:[%s3] sm:$0xf]
        %v542 = vlaneseq
        %v543 = vshrl.u32 %v542, 7
        %v544 = vsub.s32 0, %v543
        %v545 = vrot.slane %v540, %v544
        %v546 = vlaneseq
        %v547 = vshrl.u32 %v546, 7
        %v548 = vsub.s32 1, %v547
        %v549 = vrot.slane %v540, %v548
        %v550 = vlaneseq
        %v551 = vshrl.u32 %v550, 7
        %v552 = vsub.s32 2, %v551
        %v553 = vrot.slane %v540, %v552
        %v554 = vlaneseq
        %v555 = vshrl.u32 %v554, 7
        %v556 = vsub.s32 3, %v555
        %v557 = vrot.slane %v540, %v556
        %562 = vmatprep.subr.mxu0 %v413
        %563 = vmatpush1.msra.mxu0 %v412
        %564 = vmatprep.subr.mxu0 %v417
        %565 = vmatpush1.msra.mxu0 %v416
        %566 = vmatprep.subr.mxu0 %v421
        %567 = vmatpush1.msra.mxu0 %v420
        %568 = vmatprep.subr.mxu0 %v425
        %569 = vmatpush1.msra.mxu0 %v424
        %570 = vmatprep.subr.mxu0 %v429
        %571 = vmatpush1.msra.mxu0 %v428
        %572 = vmatprep.subr.mxu0 %v433
        %573 = vmatpush1.msra.mxu0 %v432
        %574 = vmatprep.subr.mxu0 %v437
        %575 = vmatpush1.msra.mxu0 %v436
        %576 = vmatprep.subr.mxu0 %v441
        %577 = vmatpush1.msra.mxu0 %v440
        %578 = vmatprep.subr.mxu0 %v445
        %579 = vmatpush1.msra.mxu0 %v444
        %580 = vmatprep.subr.mxu0 %v449
        %581 = vmatpush1.msra.mxu0 %v448
        %582 = vmatprep.subr.mxu0 %v453
        %583 = vmatpush1.msra.mxu0 %v452
        %584 = vmatprep.subr.mxu0 %v457
        %585 = vmatpush1.msra.mxu0 %v456
        %586 = vmatprep.subr.mxu0 %v461
        %587 = vmatpush1.msra.mxu0 %v460
        %588 = vmatprep.subr.mxu0 %v465
        %589 = vmatpush1.msra.mxu0 %v464
        %590 = vmatprep.subr.mxu0 %v469
        %591 = vmatpush1.msra.mxu0 %v468
        %592 = vmatprep.subr.mxu0 %v473
        %593 = vmatpush1.msra.mxu0 %v472
        %594 = vmatprep.subr.mxu0 %v477
        %595 = vmatpush1.msra.mxu0 %v476
        %596 = vmatprep.subr.mxu0 %v481
        %597 = vmatpush1.msra.mxu0 %v480
        %598 = vmatprep.subr.mxu0 %v485
        %599 = vmatpush1.msra.mxu0 %v484
        %600 = vmatprep.subr.mxu0 %v489
        %601 = vmatpush1.msra.mxu0 %v488
        %602 = vmatprep.subr.mxu0 %v493
        %603 = vmatpush1.msra.mxu0 %v492
        %604 = vmatprep.subr.mxu0 %v497
        %605 = vmatpush1.msra.mxu0 %v496
        %606 = vmatprep.subr.mxu0 %v501
        %607 = vmatpush1.msra.mxu0 %v500
        %608 = vmatprep.subr.mxu0 %v505
        %609 = vmatpush1.msra.mxu0 %v504
        %610 = vmatprep.subr.mxu0 %v509
        %611 = vmatpush1.msra.mxu0 %v508
        %612 = vmatprep.subr.mxu0 %v513
        %613 = vmatpush1.msra.mxu0 %v512
        %614 = vmatprep.subr.mxu0 %v517
        %615 = vmatpush1.msra.mxu0 %v516
        %616 = vmatprep.subr.mxu0 %v521
        %617 = vmatpush1.msra.mxu0 %v520
        %618 = vmatprep.subr.mxu0 %v525
        %619 = vmatpush1.msra.mxu0 %v524
        %620 = vmatprep.subr.mxu0 %v529
        %621 = vmatpush1.msra.mxu0 %v528
        %622 = vmatprep.subr.mxu0 %v533
        %623 = vmatpush1.msra.mxu0 %v532
        %624 = vmatprep.subr.mxu0 %v537
        %625 = vmatpush1.msra.mxu0 %v536
        %626 = vmatprep.mubr.f32.mxu0 %v410
        %627 = vmatmul.mubr.f32.gmra.mrb[0].mxu0 %v409
        %v628 = vpop.f32.mrb[0].mxu0
        %v629 = vadd.f32 %v545, %v628
        %v630 = vpop.f32.mrb[0].mxu0
        %v631 = vadd.f32 %v549, %v630
        %632 = vdwg.mxu0
        %633 = vmatprep.subr.mxu0 %v415
        %634 = vmatpush1.msra.mxu0 %v414
        %635 = vmatprep.subr.mxu0 %v419
        %636 = vmatpush1.msra.mxu0 %v418
        %637 = vmatprep.subr.mxu0 %v423
        %638 = vmatpush1.msra.mxu0 %v422
        %639 = vmatprep.subr.mxu0 %v427
        %640 = vmatpush1.msra.mxu0 %v426
        %641 = vmatprep.subr.mxu0 %v431
        %642 = vmatpush1.msra.mxu0 %v430
        %643 = vmatprep.subr.mxu0 %v435
        %644 = vmatpush1.msra.mxu0 %v434
        %645 = vmatprep.subr.mxu0 %v439
        %646 = vmatpush1.msra.mxu0 %v438
        %647 = vmatprep.subr.mxu0 %v443
        %648 = vmatpush1.msra.mxu0 %v442
        %649 = vmatprep.subr.mxu0 %v447
        %650 = vmatpush1.msra.mxu0 %v446
        %651 = vmatprep.subr.mxu0 %v451
        %652 = vmatpush1.msra.mxu0 %v450
        %653 = vmatprep.subr.mxu0 %v455
        %654 = vmatpush1.msra.mxu0 %v454
        %655 = vmatprep.subr.mxu0 %v459
        %656 = vmatpush1.msra.mxu0 %v458
        %657 = vmatprep.subr.mxu0 %v463
        %658 = vmatpush1.msra.mxu0 %v462
        %659 = vmatprep.subr.mxu0 %v467
        %660 = vmatpush1.msra.mxu0 %v466
        %661 = vmatprep.subr.mxu0 %v471
        %662 = vmatpush1.msra.mxu0 %v470
        %663 = vmatprep.subr.mxu0 %v475
        %664 = vmatpush1.msra.mxu0 %v474
        %665 = vmatprep.subr.mxu0 %v479
        %666 = vmatpush1.msra.mxu0 %v478
        %667 = vmatprep.subr.mxu0 %v483
        %668 = vmatpush1.msra.mxu0 %v482
        %669 = vmatprep.subr.mxu0 %v487
        %670 = vmatpush1.msra.mxu0 %v486
        %671 = vmatprep.subr.mxu0 %v491
        %672 = vmatpush1.msra.mxu0 %v490
        %673 = vmatprep.subr.mxu0 %v495
        %674 = vmatpush1.msra.mxu0 %v494
        %675 = vmatprep.subr.mxu0 %v499
        %676 = vmatpush1.msra.mxu0 %v498
        %677 = vmatprep.subr.mxu0 %v503
        %678 = vmatpush1.msra.mxu0 %v502
        %679 = vmatprep.subr.mxu0 %v507
        %680 = vmatpush1.msra.mxu0 %v506
        %681 = vmatprep.subr.mxu0 %v511
        %682 = vmatpush1.msra.mxu0 %v510
        %683 = vmatprep.subr.mxu0 %v515
        %684 = vmatpush1.msra.mxu0 %v514
        %685 = vmatprep.subr.mxu0 %v519
        %686 = vmatpush1.msra.mxu0 %v518
        %687 = vmatprep.subr.mxu0 %v523
        %688 = vmatpush1.msra.mxu0 %v522
        %689 = vmatprep.subr.mxu0 %v527
        %690 = vmatpush1.msra.mxu0 %v526
        %691 = vmatprep.subr.mxu0 %v531
        %692 = vmatpush1.msra.mxu0 %v530
        %693 = vmatprep.subr.mxu0 %v535
        %694 = vmatpush1.msra.mxu0 %v534
        %695 = vmatprep.subr.mxu0 %v539
        %696 = vmatpush1.msra.mxu0 %v538
        %697 = vmatprep.mubr.f32.mxu0 %v410
        %698 = vmatmul.mubr.f32.gmra.mrb[0].mxu0 %v409
        %v699 = vpop.f32.mrb[0].mxu0
        %v700 = vadd.f32 %v553, %v699
        %v701 = vpop.f32.mrb[0].mxu0
        %v702 = vadd.f32 %v557, %v701
        %703 = vdwg.mxu0
        %v704 = vxor.u32 %v629, 2147483648
        %v705 = vmul.f32 %v704, 1.442695
        %v706 = vpow.pop %v705
        %v707 = vadd.f32 %v706, 1.0
        %v708 = vrcp.pop %v707
        %v709 = vmul.f32 1.0, %v708
        %v710 = vxor.u32 %v631, 2147483648
        %v711 = vmul.f32 %v710, 1.442695
        %v712 = vpow.pop %v711
        %v713 = vadd.f32 %v712, 1.0
        %v714 = vrcp.pop %v713
        %v715 = vmul.f32 1.0, %v714
        %v716 = vtanh.pop %v700
        %v717 = vxor.u32 %v702, 2147483648
        %v718 = vmul.f32 %v717, 1.442695
        %v719 = vpow.pop %v718
        %v720 = vadd.f32 %v719, 1.0
        %v721 = vrcp.pop %v720
        %v722 = vmul.f32 1.0, %v721
        %v723 = vmul.f32 %v715, %v411
        %v724 = vmul.f32 %v709, %v716
        %v725 = vadd.f32 %v723, %v724
        %v726 = vtanh.pop %v725
        %v727 = vmul.f32 %v722, %v726
        %728 = vst [vmem:[#allocation2] sm:$0x3] %v727
        %729 = vst [vmem:[#allocation3] sm:$0x3] %v725
        %s730 = scalar_lea.vmem [#allocation2], 2
        %v731 = vld [vmem:[%s730] sm:$0x3]
        %s732 = scalar_lea.vmem [#allocation3], 2
        %v733 = vld [vmem:[%s732] sm:$0x3]
        %s734 = scalar_lea.vmem [#allocation4], 1024
        %v735 = vld [vmem:[%s734] sm:$0xff]
        %v736 = vld [vmem:[%s734 + $0x8] sm:$0xff]
        %v737 = vld [vmem:[%s734 + $0x10] sm:$0xff]
        %v738 = vld [vmem:[%s734 + $0x18] sm:$0xff]
        %v739 = vld [vmem:[%s734 + $0x20] sm:$0xff]
        %v740 = vld [vmem:[%s734 + $0x28] sm:$0xff]
        %v741 = vld [vmem:[%s734 + $0x30] sm:$0xff]
        %v742 = vld [vmem:[%s734 + $0x38] sm:$0xff]
        %v743 = vld [vmem:[%s734 + $0x40] sm:$0xff]
        %v744 = vld [vmem:[%s734 + $0x48] sm:$0xff]
        %v745 = vld [vmem:[%s734 + $0x50] sm:$0xff]
        %v746 = vld [vmem:[%s734 + $0x58] sm:$0xff]
        %v747 = vld [vmem:[%s734 + $0x60] sm:$0xff]
        %v748 = vld [vmem:[%s734 + $0x68] sm:$0xff]
        %v749 = vld [vmem:[%s734 + $0x70] sm:$0xff]
        %v750 = vld [vmem:[%s734 + $0x78] sm:$0xff]
        %v751 = vld [vmem:[%s734 + $0x80] sm:$0xff]
        %v752 = vld [vmem:[%s734 + $0x88] sm:$0xff]
        %v753 = vld [vmem:[%s734 + $0x90] sm:$0xff]
        %v754 = vld [vmem:[%s734 + $0x98] sm:$0xff]
        %v755 = vld [vmem:[%s734 + $0xa0] sm:$0xff]
        %v756 = vld [vmem:[%s734 + $0xa8] sm:$0xff]
        %v757 = vld [vmem:[%s734 + $0xb0] sm:$0xff]
        %v758 = vld [vmem:[%s734 + $0xb8] sm:$0xff]
        %v759 = vld [vmem:[%s734 + $0xc0] sm:$0xff]
        %v760 = vld [vmem:[%s734 + $0xc8] sm:$0xff]
        %v761 = vld [vmem:[%s734 + $0xd0] sm:$0xff]
        %v762 = vld [vmem:[%s734 + $0xd8] sm:$0xff]
        %v763 = vld [vmem:[%s734 + $0xe0] sm:$0xff]
        %v764 = vld [vmem:[%s734 + $0xe8] sm:$0xff]
        %v765 = vld [vmem:[%s734 + $0xf0] sm:$0xff]
        %v766 = vld [vmem:[%s734 + $0xf8] sm:$0xff]
        %v767 = vld [vmem:[%s734 + $0x100] sm:$0xff]
        %v768 = vld [vmem:[%s734 + $0x108] sm:$0xff]
        %v769 = vld [vmem:[%s734 + $0x110] sm:$0xff]
        %v770 = vld [vmem:[%s734 + $0x118] sm:$0xff]
        %v771 = vld [vmem:[%s734 + $0x120] sm:$0xff]
        %v772 = vld [vmem:[%s734 + $0x128] sm:$0xff]
        %v773 = vld [vmem:[%s734 + $0x130] sm:$0xff]
        %v774 = vld [vmem:[%s734 + $0x138] sm:$0xff]
        %v775 = vld [vmem:[%s734 + $0x140] sm:$0xff]
        %v776 = vld [vmem:[%s734 + $0x148] sm:$0xff]
        %v777 = vld [vmem:[%s734 + $0x150] sm:$0xff]
        %v778 = vld [vmem:[%s734 + $0x158] sm:$0xff]
        %v779 = vld [vmem:[%s734 + $0x160] sm:$0xff]
        %v780 = vld [vmem:[%s734 + $0x168] sm:$0xff]
        %v781 = vld [vmem:[%s734 + $0x170] sm:$0xff]
        %v782 = vld [vmem:[%s734 + $0x178] sm:$0xff]
        %v783 = vld [vmem:[%s734 + $0x180] sm:$0xff]
        %v784 = vld [vmem:[%s734 + $0x188] sm:$0xff]
        %v785 = vld [vmem:[%s734 + $0x190] sm:$0xff]
        %v786 = vld [vmem:[%s734 + $0x198] sm:$0xff]
        %v787 = vld [vmem:[%s734 + $0x1a0] sm:$0xff]
        %v788 = vld [vmem:[%s734 + $0x1a8] sm:$0xff]
        %v789 = vld [vmem:[%s734 + $0x1b0] sm:$0xff]
        %v790 = vld [vmem:[%s734 + $0x1b8] sm:$0xff]
        %v791 = vld [vmem:[%s734 + $0x1c0] sm:$0xff]
        %v792 = vld [vmem:[%s734 + $0x1c8] sm:$0xff]
        %v793 = vld [vmem:[%s734 + $0x1d0] sm:$0xff]
        %v794 = vld [vmem:[%s734 + $0x1d8] sm:$0xff]
        %v795 = vld [vmem:[%s734 + $0x1e0] sm:$0xff]
        %v796 = vld [vmem:[%s734 + $0x1e8] sm:$0xff]
        %v797 = vld [vmem:[%s734 + $0x1f0] sm:$0xff]
        %v798 = vld [vmem:[%s734 + $0x1f8] sm:$0xff]
        %v799 = vld [vmem:[%s734 + $0x200] sm:$0xff]
        %v800 = vld [vmem:[%s734 + $0x208] sm:$0xff]
        %v801 = vld [vmem:[%s734 + $0x210] sm:$0xff]
        %v802 = vld [vmem:[%s734 + $0x218] sm:$0xff]
        %v803 = vld [vmem:[%s734 + $0x220] sm:$0xff]
        %v804 = vld [vmem:[%s734 + $0x228] sm:$0xff]
        %v805 = vld [vmem:[%s734 + $0x230] sm:$0xff]
        %v806 = vld [vmem:[%s734 + $0x238] sm:$0xff]
        %v807 = vld [vmem:[%s734 + $0x240] sm:$0xff]
        %v808 = vld [vmem:[%s734 + $0x248] sm:$0xff]
        %v809 = vld [vmem:[%s734 + $0x250] sm:$0xff]
        %v810 = vld [vmem:[%s734 + $0x258] sm:$0xff]
        %v811 = vld [vmem:[%s734 + $0x260] sm:$0xff]
        %v812 = vld [vmem:[%s734 + $0x268] sm:$0xff]
        %v813 = vld [vmem:[%s734 + $0x270] sm:$0xff]
        %v814 = vld [vmem:[%s734 + $0x278] sm:$0xff]
        %v815 = vld [vmem:[%s734 + $0x280] sm:$0xff]
        %v816 = vld [vmem:[%s734 + $0x288] sm:$0xff]
        %v817 = vld [vmem:[%s734 + $0x290] sm:$0xff]
        %v818 = vld [vmem:[%s734 + $0x298] sm:$0xff]
        %v819 = vld [vmem:[%s734 + $0x2a0] sm:$0xff]
        %v820 = vld [vmem:[%s734 + $0x2a8] sm:$0xff]
        %v821 = vld [vmem:[%s734 + $0x2b0] sm:$0xff]
        %v822 = vld [vmem:[%s734 + $0x2b8] sm:$0xff]
        %v823 = vld [vmem:[%s734 + $0x2c0] sm:$0xff]
        %v824 = vld [vmem:[%s734 + $0x2c8] sm:$0xff]
        %v825 = vld [vmem:[%s734 + $0x2d0] sm:$0xff]
        %v826 = vld [vmem:[%s734 + $0x2d8] sm:$0xff]
        %v827 = vld [vmem:[%s734 + $0x2e0] sm:$0xff]
        %v828 = vld [vmem:[%s734 + $0x2e8] sm:$0xff]
        %v829 = vld [vmem:[%s734 + $0x2f0] sm:$0xff]
        %v830 = vld [vmem:[%s734 + $0x2f8] sm:$0xff]
        %v831 = vld [vmem:[%s734 + $0x300] sm:$0xff]
        %v832 = vld [vmem:[%s734 + $0x308] sm:$0xff]
        %v833 = vld [vmem:[%s734 + $0x310] sm:$0xff]
        %v834 = vld [vmem:[%s734 + $0x318] sm:$0xff]
        %v835 = vld [vmem:[%s734 + $0x320] sm:$0xff]
        %v836 = vld [vmem:[%s734 + $0x328] sm:$0xff]
        %v837 = vld [vmem:[%s734 + $0x330] sm:$0xff]
        %v838 = vld [vmem:[%s734 + $0x338] sm:$0xff]
        %v839 = vld [vmem:[%s734 + $0x340] sm:$0xff]
        %v840 = vld [vmem:[%s734 + $0x348] sm:$0xff]
        %v841 = vld [vmem:[%s734 + $0x350] sm:$0xff]
        %v842 = vld [vmem:[%s734 + $0x358] sm:$0xff]
        %v843 = vld [vmem:[%s734 + $0x360] sm:$0xff]
        %v844 = vld [vmem:[%s734 + $0x368] sm:$0xff]
        %v845 = vld [vmem:[%s734 + $0x370] sm:$0xff]
        %v846 = vld [vmem:[%s734 + $0x378] sm:$0xff]
        %v847 = vld [vmem:[%s734 + $0x380] sm:$0xff]
        %v848 = vld [vmem:[%s734 + $0x388] sm:$0xff]
        %v849 = vld [vmem:[%s734 + $0x390] sm:$0xff]
        %v850 = vld [vmem:[%s734 + $0x398] sm:$0xff]
        %v851 = vld [vmem:[%s734 + $0x3a0] sm:$0xff]
        %v852 = vld [vmem:[%s734 + $0x3a8] sm:$0xff]
        %v853 = vld [vmem:[%s734 + $0x3b0] sm:$0xff]
        %v854 = vld [vmem:[%s734 + $0x3b8] sm:$0xff]
        %v855 = vld [vmem:[%s734 + $0x3c0] sm:$0xff]
        %v856 = vld [vmem:[%s734 + $0x3c8] sm:$0xff]
        %v857 = vld [vmem:[%s734 + $0x3d0] sm:$0xff]
        %v858 = vld [vmem:[%s734 + $0x3d8] sm:$0xff]
        %v859 = vld [vmem:[%s734 + $0x3e0] sm:$0xff]
        %v860 = vld [vmem:[%s734 + $0x3e8] sm:$0xff]
        %v861 = vld [vmem:[%s734 + $0x3f0] sm:$0xff]
        %v862 = vld [vmem:[%s734 + $0x3f8] sm:$0xff]
        %s863 = scalar_lea.vmem %s3, 4
        %v864 = vld [vmem:[%s863] sm:$0xf]
        %v866 = vlaneseq
        %v867 = vshrl.u32 %v866, 7
        %v868 = vsub.s32 0, %v867
        %v869 = vrot.slane %v864, %v868
        %v870 = vlaneseq
        %v871 = vshrl.u32 %v870, 7
        %v872 = vsub.s32 1, %v871
        %v873 = vrot.slane %v864, %v872
        %v874 = vlaneseq
        %v875 = vshrl.u32 %v874, 7
        %v876 = vsub.s32 2, %v875
        %v877 = vrot.slane %v864, %v876
        %v878 = vlaneseq
        %v879 = vshrl.u32 %v878, 7
        %v880 = vsub.s32 3, %v879
        %v881 = vrot.slane %v864, %v880
        %886 = vmatprep.subr.mxu0 %v736
        %887 = vmatpush1.msra.mxu0 %v735
        %888 = vmatprep.subr.mxu0 %v740
        %889 = vmatpush1.msra.mxu0 %v739
        %890 = vmatprep.subr.mxu0 %v744
        %891 = vmatpush1.msra.mxu0 %v743
        %892 = vmatprep.subr.mxu0 %v748
        %893 = vmatpush1.msra.mxu0 %v747
        %894 = vmatprep.subr.mxu0 %v752
        %895 = vmatpush1.msra.mxu0 %v751
        %896 = vmatprep.subr.mxu0 %v756
        %897 = vmatpush1.msra.mxu0 %v755
        %898 = vmatprep.subr.mxu0 %v760
        %899 = vmatpush1.msra.mxu0 %v759
        %900 = vmatprep.subr.mxu0 %v764
        %901 = vmatpush1.msra.mxu0 %v763
        %902 = vmatprep.subr.mxu0 %v768
        %903 = vmatpush1.msra.mxu0 %v767
        %904 = vmatprep.subr.mxu0 %v772
        %905 = vmatpush1.msra.mxu0 %v771
        %906 = vmatprep.subr.mxu0 %v776
        %907 = vmatpush1.msra.mxu0 %v775
        %908 = vmatprep.subr.mxu0 %v780
        %909 = vmatpush1.msra.mxu0 %v779
        %910 = vmatprep.subr.mxu0 %v784
        %911 = vmatpush1.msra.mxu0 %v783
        %912 = vmatprep.subr.mxu0 %v788
        %913 = vmatpush1.msra.mxu0 %v787
        %914 = vmatprep.subr.mxu0 %v792
        %915 = vmatpush1.msra.mxu0 %v791
        %916 = vmatprep.subr.mxu0 %v796
        %917 = vmatpush1.msra.mxu0 %v795
        %918 = vmatprep.subr.mxu0 %v800
        %919 = vmatpush1.msra.mxu0 %v799
        %920 = vmatprep.subr.mxu0 %v804
        %921 = vmatpush1.msra.mxu0 %v803
        %922 = vmatprep.subr.mxu0 %v808
        %923 = vmatpush1.msra.mxu0 %v807
        %924 = vmatprep.subr.mxu0 %v812
        %925 = vmatpush1.msra.mxu0 %v811
        %926 = vmatprep.subr.mxu0 %v816
        %927 = vmatpush1.msra.mxu0 %v815
        %928 = vmatprep.subr.mxu0 %v820
        %929 = vmatpush1.msra.mxu0 %v819
        %930 = vmatprep.subr.mxu0 %v824
        %931 = vmatpush1.msra.mxu0 %v823
        %932 = vmatprep.subr.mxu0 %v828
        %933 = vmatpush1.msra.mxu0 %v827
        %934 = vmatprep.subr.mxu0 %v832
        %935 = vmatpush1.msra.mxu0 %v831
        %936 = vmatprep.subr.mxu0 %v836
        %937 = vmatpush1.msra.mxu0 %v835
        %938 = vmatprep.subr.mxu0 %v840
        %939 = vmatpush1.msra.mxu0 %v839
        %940 = vmatprep.subr.mxu0 %v844
        %941 = vmatpush1.msra.mxu0 %v843
        %942 = vmatprep.subr.mxu0 %v848
        %943 = vmatpush1.msra.mxu0 %v847
        %944 = vmatprep.subr.mxu0 %v852
        %945 = vmatpush1.msra.mxu0 %v851
        %946 = vmatprep.subr.mxu0 %v856
        %947 = vmatpush1.msra.mxu0 %v855
        %948 = vmatprep.subr.mxu0 %v860
        %949 = vmatpush1.msra.mxu0 %v859
        %950 = vmatprep.mubr.f32.mxu0 %v731
        %951 = vmatmul.mubr.f32.gmra.mrb[0].mxu0 %v727
        %v952 = vpop.f32.mrb[0].mxu0
        %v953 = vadd.f32 %v869, %v952
        %v954 = vpop.f32.mrb[0].mxu0
        %v955 = vadd.f32 %v873, %v954
        %956 = vdwg.mxu0
        %957 = vmatprep.subr.mxu0 %v738
        %958 = vmatpush1.msra.mxu0 %v737
        %959 = vmatprep.subr.mxu0 %v742
        %960 = vmatpush1.msra.mxu0 %v741
        %961 = vmatprep.subr.mxu0 %v746
        %962 = vmatpush1.msra.mxu0 %v745
        %963 = vmatprep.subr.mxu0 %v750
        %964 = vmatpush1.msra.mxu0 %v749
        %965 = vmatprep.subr.mxu0 %v754
        %966 = vmatpush1.msra.mxu0 %v753
        %967 = vmatprep.subr.mxu0 %v758
        %968 = vmatpush1.msra.mxu0 %v757
        %969 = vmatprep.subr.mxu0 %v762
        %970 = vmatpush1.msra.mxu0 %v761
        %971 = vmatprep.subr.mxu0 %v766
        %972 = vmatpush1.msra.mxu0 %v765
        %973 = vmatprep.subr.mxu0 %v770
        %974 = vmatpush1.msra.mxu0 %v769
        %975 = vmatprep.subr.mxu0 %v774
        %976 = vmatpush1.msra.mxu0 %v773
        %977 = vmatprep.subr.mxu0 %v778
        %978 = vmatpush1.msra.mxu0 %v777
        %979 = vmatprep.subr.mxu0 %v782
        %980 = vmatpush1.msra.mxu0 %v781
        %981 = vmatprep.subr.mxu0 %v786
        %982 = vmatpush1.msra.mxu0 %v785
        %983 = vmatprep.subr.mxu0 %v790
        %984 = vmatpush1.msra.mxu0 %v789
        %985 = vmatprep.subr.mxu0 %v794
        %986 = vmatpush1.msra.mxu0 %v793
        %987 = vmatprep.subr.mxu0 %v798
        %988 = vmatpush1.msra.mxu0 %v797
        %989 = vmatprep.subr.mxu0 %v802
        %990 = vmatpush1.msra.mxu0 %v801
        %991 = vmatprep.subr.mxu0 %v806
        %992 = vmatpush1.msra.mxu0 %v805
        %993 = vmatprep.subr.mxu0 %v810
        %994 = vmatpush1.msra.mxu0 %v809
        %995 = vmatprep.subr.mxu0 %v814
        %996 = vmatpush1.msra.mxu0 %v813
        %997 = vmatprep.subr.mxu0 %v818
        %998 = vmatpush1.msra.mxu0 %v817
        %999 = vmatprep.subr.mxu0 %v822
        %1000 = vmatpush1.msra.mxu0 %v821
        %1001 = vmatprep.subr.mxu0 %v826
        %1002 = vmatpush1.msra.mxu0 %v825
        %1003 = vmatprep.subr.mxu0 %v830
        %1004 = vmatpush1.msra.mxu0 %v829
        %1005 = vmatprep.subr.mxu0 %v834
        %1006 = vmatpush1.msra.mxu0 %v833
        %1007 = vmatprep.subr.mxu0 %v838
        %1008 = vmatpush1.msra.mxu0 %v837
        %1009 = vmatprep.subr.mxu0 %v842
        %1010 = vmatpush1.msra.mxu0 %v841
        %1011 = vmatprep.subr.mxu0 %v846
        %1012 = vmatpush1.msra.mxu0 %v845
        %1013 = vmatprep.subr.mxu0 %v850
        %1014 = vmatpush1.msra.mxu0 %v849
        %1015 = vmatprep.subr.mxu0 %v854
        %1016 = vmatpush1.msra.mxu0 %v853
        %1017 = vmatprep.subr.mxu0 %v858
        %1018 = vmatpush1.msra.mxu0 %v857
        %1019 = vmatprep.subr.mxu0 %v862
        %1020 = vmatpush1.msra.mxu0 %v861
        %1021 = vmatprep.mubr.f32.mxu0 %v731
        %1022 = vmatmul.mubr.f32.gmra.mrb[0].mxu0 %v727
        %v1023 = vpop.f32.mrb[0].mxu0
        %v1024 = vadd.f32 %v877, %v1023
        %v1025 = vpop.f32.mrb[0].mxu0
        %v1026 = vadd.f32 %v881, %v1025
        %1027 = vdwg.mxu0
        %v1028 = vxor.u32 %v953, 2147483648
        %v1029 = vmul.f32 %v1028, 1.442695
        %v1030 = vpow.pop %v1029
        %v1031 = vadd.f32 %v1030, 1.0
        %v1032 = vrcp.pop %v1031
        %v1033 = vmul.f32 1.0, %v1032
        %v1034 = vxor.u32 %v955, 2147483648
        %v1035 = vmul.f32 %v1034, 1.442695
        %v1036 = vpow.pop %v1035
        %v1037 = vadd.f32 %v1036, 1.0
        %v1038 = vrcp.pop %v1037
        %v1039 = vmul.f32 1.0, %v1038
        %v1040 = vtanh.pop %v1024
        %v1041 = vxor.u32 %v1026, 2147483648
        %v1042 = vmul.f32 %v1041, 1.442695
        %v1043 = vpow.pop %v1042
        %v1044 = vadd.f32 %v1043, 1.0
        %v1045 = vrcp.pop %v1044
        %v1046 = vmul.f32 1.0, %v1045
        %v1047 = vmul.f32 %v1039, %v733
        %v1048 = vmul.f32 %v1033, %v1040
        %v1049 = vadd.f32 %v1047, %v1048
        %v1050 = vtanh.pop %v1049
        %v1051 = vmul.f32 %v1046, %v1050
        %1052 = vst [vmem:[%s730] sm:$0x3] %v1051
        %1053 = vst [vmem:[%s732] sm:$0x3] %v1049
        %v1054 = vld [vmem:[#allocation6] sm:$0xff]
        %v1055 = vld [vmem:[#allocation6 + $0x8] sm:$0xff]
        %v1056 = vld [vmem:[#allocation6 + $0x10] sm:$0xff]
        %v1057 = vld [vmem:[#allocation6 + $0x18] sm:$0xff]
        %v1058 = vld [vmem:[#allocation6 + $0x20] sm:$0xff]
        %v1059 = vld [vmem:[#allocation6 + $0x28] sm:$0xff]
        %v1060 = vld [vmem:[#allocation6 + $0x30] sm:$0xff]
        %v1061 = vld [vmem:[#allocation6 + $0x38] sm:$0xff]
        %v1062 = vld [vmem:[#allocation6 + $0x40] sm:$0xff]
        %v1063 = vld [vmem:[#allocation6 + $0x48] sm:$0xff]
        %v1064 = vld [vmem:[#allocation6 + $0x50] sm:$0xff]
        %v1065 = vld [vmem:[#allocation6 + $0x58] sm:$0xff]
        %v1066 = vld [vmem:[#allocation6 + $0x60] sm:$0xff]
        %v1067 = vld [vmem:[#allocation6 + $0x68] sm:$0xff]
        %v1068 = vld [vmem:[#allocation6 + $0x70] sm:$0xff]
        %v1069 = vld [vmem:[#allocation6 + $0x78] sm:$0xff]
        %v1070 = vld [vmem:[#allocation6 + $0x80] sm:$0xff]
        %v1071 = vld [vmem:[#allocation6 + $0x88] sm:$0xff]
        %v1072 = vld [vmem:[#allocation6 + $0x90] sm:$0xff]
        %v1073 = vld [vmem:[#allocation6 + $0x98] sm:$0xff]
        %v1074 = vld [vmem:[#allocation6 + $0xa0] sm:$0xff]
        %v1075 = vld [vmem:[#allocation6 + $0xa8] sm:$0xff]
        %v1076 = vld [vmem:[#allocation6 + $0xb0] sm:$0xff]
        %v1077 = vld [vmem:[#allocation6 + $0xb8] sm:$0xff]
        %v1078 = vld [vmem:[#allocation6 + $0xc0] sm:$0xff]
        %v1079 = vld [vmem:[#allocation6 + $0xc8] sm:$0xff]
        %v1080 = vld [vmem:[#allocation6 + $0xd0] sm:$0xff]
        %v1081 = vld [vmem:[#allocation6 + $0xd8] sm:$0xff]
        %v1082 = vld [vmem:[#allocation6 + $0xe0] sm:$0xff]
        %v1083 = vld [vmem:[#allocation6 + $0xe8] sm:$0xff]
        %v1084 = vld [vmem:[#allocation6 + $0xf0] sm:$0xff]
        %v1085 = vld [vmem:[#allocation6 + $0xf8] sm:$0xff]
        %v1086 = vld [vmem:[%s5] sm:$0x3]
        %v1088 = vlaneseq
        %v1089 = vshrl.u32 %v1088, 7
        %v1090 = vsub.s32 0, %v1089
        %v1091 = vrot.slane %v1086, %v1090
        %v1092 = vlaneseq
        %v1093 = vshrl.u32 %v1092, 7
        %v1094 = vsub.s32 1, %v1093
        %v1095 = vrot.slane %v1086, %v1094
        %1098 = vmatprep.subr.mxu0 %v1055
        %1099 = vmatpush1.msra.mxu0 %v1054
        %1100 = vmatprep.subr.mxu0 %v1057
        %1101 = vmatpush1.msra.mxu0 %v1056
        %1102 = vmatprep.subr.mxu0 %v1059
        %1103 = vmatpush1.msra.mxu0 %v1058
        %1104 = vmatprep.subr.mxu0 %v1061
        %1105 = vmatpush1.msra.mxu0 %v1060
        %1106 = vmatprep.subr.mxu0 %v1063
        %1107 = vmatpush1.msra.mxu0 %v1062
        %1108 = vmatprep.subr.mxu0 %v1065
        %1109 = vmatpush1.msra.mxu0 %v1064
        %1110 = vmatprep.subr.mxu0 %v1067
        %1111 = vmatpush1.msra.mxu0 %v1066
        %1112 = vmatprep.subr.mxu0 %v1069
        %1113 = vmatpush1.msra.mxu0 %v1068
        %1114 = vmatprep.subr.mxu0 %v1071
        %1115 = vmatpush1.msra.mxu0 %v1070
        %1116 = vmatprep.subr.mxu0 %v1073
        %1117 = vmatpush1.msra.mxu0 %v1072
        %1118 = vmatprep.subr.mxu0 %v1075
        %1119 = vmatpush1.msra.mxu0 %v1074
        %1120 = vmatprep.subr.mxu0 %v1077
        %1121 = vmatpush1.msra.mxu0 %v1076
        %1122 = vmatprep.subr.mxu0 %v1079
        %1123 = vmatpush1.msra.mxu0 %v1078
        %1124 = vmatprep.subr.mxu0 %v1081
        %1125 = vmatpush1.msra.mxu0 %v1080
        %1126 = vmatprep.subr.mxu0 %v1083
        %1127 = vmatpush1.msra.mxu0 %v1082
        %1128 = vmatprep.subr.mxu0 %v1085
        %1129 = vmatpush1.msra.mxu0 %v1084
        %1130 = vmatprep.subr.mxu0 0.0
        %1131 = vmatpush1.msra.mxu0 0.0
        %1132 = vmatprep.subr.mxu0 0.0
        %1133 = vmatpush1.msra.mxu0 0.0
        %1134 = vmatprep.subr.mxu0 0.0
        %1135 = vmatpush1.msra.mxu0 0.0
        %1136 = vmatprep.subr.mxu0 0.0
        %1137 = vmatpush1.msra.mxu0 0.0
        %1138 = vmatprep.subr.mxu0 0.0
        %1139 = vmatpush1.msra.mxu0 0.0
        %1140 = vmatprep.subr.mxu0 0.0
        %1141 = vmatpush1.msra.mxu0 0.0
        %1142 = vmatprep.subr.mxu0 0.0
        %1143 = vmatpush1.msra.mxu0 0.0
        %1144 = vmatprep.subr.mxu0 0.0
        %1145 = vmatpush1.msra.mxu0 0.0
        %1146 = vmatprep.subr.mxu0 0.0
        %1147 = vmatpush1.msra.mxu0 0.0
        %1148 = vmatprep.subr.mxu0 0.0
        %1149 = vmatpush1.msra.mxu0 0.0
        %1150 = vmatprep.subr.mxu0 0.0
        %1151 = vmatpush1.msra.mxu0 0.0
        %1152 = vmatprep.subr.mxu0 0.0
        %1153 = vmatpush1.msra.mxu0 0.0
        %1154 = vmatprep.subr.mxu0 0.0
        %1155 = vmatpush1.msra.mxu0 0.0
        %1156 = vmatprep.subr.mxu0 0.0
        %1157 = vmatpush1.msra.mxu0 0.0
        %1158 = vmatprep.subr.mxu0 0.0
        %1159 = vmatpush1.msra.mxu0 0.0
        %1160 = vmatprep.subr.mxu0 0.0
        %1161 = vmatpush1.msra.mxu0 0.0
        %1162 = vmatprep.mubr.f32.mxu0 0.0
        %1163 = vmatmul.mubr.f32.gmra.mrb[0].mxu0 %v1051
        %v1164 = vpop.f32.mrb[0].mxu0
        %v1165 = vadd.f32 %v1091, %v1164
        %v1166 = vpop.f32.mrb[0].mxu0
        %v1167 = vadd.f32 %v1095, %v1166
        %1168 = vdwg.mxu0
        %v1169 = vlaneseq
        %v1170 = vand.u32 %v1169, 127
        %vm1171 = vcmp.ge.s32.totalorder %v1170, 8
        %v1172 = vmul.f32 %v1165, 0.5
        %v1173 = vmul.f32 %v1172, 1.442695
        %v1174 = vpow.pop %v1173
        %v1175 = vsel %vm1171, %v1174, %v1165
        %vm1176 = vcmp.ge.s32.totalorder %v1170, 16
        %vm1177 = vcmp.lt.s32.totalorder %v1170, 24
        %vm1178 = vmand %vm1176, %vm1177
        %v1179 = vld [vmem:[%s392] sm:$0x3]
        %v1180 = vmul.f32 %v1179, %v1175
        %v1181 = vadd.f32 %v1180, %v1167
        %v1182 = vsel %vm1178, %v1181, %v1175
        %1183 = vst [vmem:[%s396] sm:$0x3] %v1182
        %p1184 = scmp.eq.s32.totalorder %s24, 7
        // Predicated region
        $region65: #{gaussian_lstm_forward.1} parent=51 // pred_check
          %p1185 = pneg %p1184
        $region66: #{gaussian_lstm_forward.1} parent=51 // pred_check_branch
          %1187 = sbr.rel (%p1185) target = $region68
        $region67: #{gaussian_lstm_forward.1} parent=51 // pred_region
          %v1188 = vld [vmem:[#allocation2] sm:$0x3]
          %v1189 = vld [vmem:[#allocation2 + $0x2] sm:$0x3]
          %1190 = vst [vmem:[%s9] sm:$0x3] %v1188
          %1191 = vst [vmem:[%s9 + $0x2] sm:$0x3] %v1189
          %v1192 = vld [vmem:[#allocation3] sm:$0x3]
          %v1193 = vld [vmem:[#allocation3 + $0x2] sm:$0x3]
          %1194 = vst [vmem:[%s10] sm:$0x3] %v1192
          %1195 = vst [vmem:[%s10 + $0x2] sm:$0x3] %v1193
        $region68: #{gaussian_lstm_forward.1} parent=51 // pred_fallthru
          _
        %p1196 = scmp.lt.s32.totalorder %s24, 7
        %s1197 = scalar_select %p1196, %s24, 7
        %s1198 = smul.addr %s1197, 2
        %s1199 = scalar_lea.vmem %s8, %s1198
        // Predicated region
        $region69: #{gaussian_lstm_forward.1} parent=51 // pred_check
          %p1200 = pneg %p220
        $region70: #{gaussian_lstm_forward.1} parent=51 // pred_check_branch
          %1202 = sbr.rel (%p1200) target = $region72
        $region71: #{gaussian_lstm_forward.1} parent=51 // pred_region
          _
        $region72: #{gaussian_lstm_forward.1} parent=51 // pred_fallthru
          _
        // Predicated region
        $region73: #{gaussian_lstm_forward.1} parent=51 // pred_check
          %p1203 = pneg %p241
        $region74: #{gaussian_lstm_forward.1} parent=51 // pred_check_branch
          %1205 = sbr.rel (%p1203) target = $region76
        $region75: #{gaussian_lstm_forward.1} parent=51 // pred_region
          _
        $region76: #{gaussian_lstm_forward.1} parent=51 // pred_fallthru
          _
        // Predicated region
        $region77: #{gaussian_lstm_forward.1} parent=51 // pred_check
          %p1206 = pneg %p262
        $region78: #{gaussian_lstm_forward.1} parent=51 // pred_check_branch
          %1208 = sbr.rel (%p1206) target = $region80
        $region79: #{gaussian_lstm_forward.1} parent=51 // pred_region
          _
        $region80: #{gaussian_lstm_forward.1} parent=51 // pred_fallthru
          _
        // Predicated region
        $region81: #{gaussian_lstm_forward.1} parent=51 // pred_check
          %p1209 = pneg %p241
        $region82: #{gaussian_lstm_forward.1} parent=51 // pred_check_branch
          %1211 = sbr.rel (%p1209) target = $region84
        $region83: #{gaussian_lstm_forward.1} parent=51 // pred_region
          _
        $region84: #{gaussian_lstm_forward.1} parent=51 // pred_fallthru
          _
        // Predicated region
        $region85: #{gaussian_lstm_forward.1} parent=51 // pred_check
          %p1212 = pneg %p262
        $region86: #{gaussian_lstm_forward.1} parent=51 // pred_check_branch
          %1214 = sbr.rel (%p1212) target = $region88
        $region87: #{gaussian_lstm_forward.1} parent=51 // pred_region
          _
        $region88: #{gaussian_lstm_forward.1} parent=51 // pred_fallthru
          _
      $region52: #{gaussian_lstm_forward.1} parent=5 // pred_fallthru
        _
      %p1215 = scmp.le.s32.totalorder 2, %s19
      // Predicated region
      $region89: #{gaussian_lstm_forward.1} parent=5 // pred_check
        %p1216 = pneg %p1215
      $region90: #{gaussian_lstm_forward.1} parent=5 // pred_check_branch
        %1218 = sbr.rel (%p1216) target = $region92
      $region91: #{gaussian_lstm_forward.1} parent=5 // pred_region
        %s1219 = ssub.s32 %s19, 2
        // Predicated region
        $region93: #{gaussian_lstm_forward.1} parent=91 // pred_check
          %p1220 = pneg %p226
        $region94: #{gaussian_lstm_forward.1} parent=91 // pred_check_branch
          %1222 = sbr.rel (%p1220) target = $region96
        $region95: #{gaussian_lstm_forward.1} parent=91 // pred_region
          %p1223 = scmp.lt.s32.totalorder %s25, 7
          %s1224 = scalar_select %p1223, %s25, 7
          %s1225 = smul.addr %s1224, 2
          %s1226 = scalar_lea.vmem %s8, %s1225
        $region96: #{gaussian_lstm_forward.1} parent=91 // pred_fallthru
          _
      $region92: #{gaussian_lstm_forward.1} parent=5 // pred_fallthru
        _
    $region6: #{gaussian_lstm_forward.1} parent=1 // loop_footer
      %s23 = sadd.s32 1, %s19
    $region7: #{gaussian_lstm_forward.1} parent=1 // loop_footer_branch
      %18 = sbr.rel target = $region3
    $region8: #{gaussian_lstm_forward.1} parent=1 // loop_exit
      _
    %1227 = vsyncpa [#allocation5], 1
    %s1228 = scalar_lea.sflag [#allocation5], 1
    %1229 = vsyncpa %s1228, 1
    %1230 = vsyncpa [#allocation7], 1

</llo_original>
